<compile_context>
chip_gen: v5e
topology: v5e:2x2
jax: 0.10.0
libtpu: 0.0.40
codegen_flags: <defaults>
</compile_context>

<pallas_src>
import functools

import jax
import jax.numpy as jnp
from jax.experimental import pallas as pl
from jax.experimental.pallas import tpu as pltpu

EPS = 1e-5
_VMEM_LIMIT_BYTES = 32 * 1024 * 1024    # scoped-VMEM budget (safe on v5e/v6e/v7x)
_TILE_BUDGET_BYTES = 4 * 1024 * 1024    # target per-batch-tile VMEM footprint


# ---------------------------------------------------------------------------
# In-kernel helpers
# ---------------------------------------------------------------------------
def _fill_padded(pad_ref, x):
    """Zero-pad `x` (NB, H, W, C) by 1 on H/W into the VMEM scratch `pad_ref`.

    The halo is built entirely in VMEM (no wrapper-side jnp.pad, no extra HBM
    traffic). The buffer is re-zeroed every grid step so the border is correct on
    both megacore TensorCores (each core runs its own subset of grid steps with
    its own scratch).
    """
    _, h, w, _ = x.shape
    pad_ref[...] = jnp.zeros(pad_ref.shape, pad_ref.dtype)
    pad_ref[:, 1:h + 1, 1:w + 1, :] = x.astype(pad_ref.dtype)


def _im2col(col_ref, pad_ref, ho, wo, ci, stride):
    """Stage the 9 taps of a 3x3 conv into one (NB, Ho, Wo, 9*Ci) bf16 buffer.

    One staging buffer reused by all taps (instead of 9 per-tap f32 temporaries),
    followed by a single K = 9*Ci MXU contraction.
    """
    for kh in range(3):
        for kw in range(3):
            if stride == 1:
                patch = pad_ref[:, kh:kh + ho, kw:kw + wo, :]
            else:
                # TODO(synk): stride-2 taps use strided in-VMEM reads; a polyphase
                # or pre-decimated layout would keep these loads dense.
                patch = pad_ref[:, pl.ds(kh, ho, stride), pl.ds(kw, wo, stride), :]
            t = kh * 3 + kw
            col_ref[:, :, :, t * ci:(t + 1) * ci] = patch.astype(col_ref.dtype)


def _store_partial_stats(stats_ref, z2d):
    """One-pass per-channel partial statistics for this tile: rows = [sum, sum(x^2)]."""
    co = z2d.shape[-1]
    stats_ref[:, 0:1, :] = jnp.sum(z2d, axis=0, keepdims=True).reshape(1, 1, co)
    stats_ref[:, 1:2, :] = jnp.sum(z2d * z2d, axis=0, keepdims=True).reshape(1, 1, co)


def _bn_scale_shift(stats_ref, g_ref, b_ref, count):
    """Reduce (num_tiles, 2, Co) partial sums and fold BN into per-channel scale/shift."""
    tot = jnp.sum(stats_ref[...].astype(jnp.float32), axis=0)          # (2, Co)
    inv_count = 1.0 / float(count)
    mean = tot[0:1, :] * inv_count
    var = jnp.maximum(tot[1:2, :] * inv_count - mean * mean, 0.0)      # biased batch var
    inv = jax.lax.rsqrt(var + EPS)
    scale = g_ref[...].astype(jnp.float32) * inv                       # (1, Co)
    shift = b_ref[...].astype(jnp.float32) - mean * scale              # (1, Co)
    return scale, shift


# ---------------------------------------------------------------------------
# Kernels
# ---------------------------------------------------------------------------
def _conv_stats_kernel(x_ref, w_ref, z_ref, stats_ref, pad_ref, col_ref, *, stride):
    """3x3 conv (stride `stride`) of one batch tile + per-tile BN partial sums."""
    nb, ho, wo, co = z_ref.shape
    ci = x_ref.shape[-1]

    _fill_padded(pad_ref, x_ref[...])
    _im2col(col_ref, pad_ref, ho, wo, ci, stride)

    m = nb * ho * wo
    z = jnp.dot(col_ref[...].reshape(m, 9 * ci), w_ref[...],      # bf16 x bf16 on MXU
                preferred_element_type=jnp.float32)               # f32 accumulation
    z_ref[...] = z.reshape(nb, ho, wo, co)
    _store_partial_stats(stats_ref, z)


def _bn_relu_conv_stats_kernel(z1_ref, stats1_ref, g_ref, b_ref, w_ref,
                               z2_ref, stats2_ref, pad_ref, col_ref, *, count):
    """Fused BN1 + ReLU1 (y1 stays resident in VMEM) + 3x3 conv2 + BN2 partial sums."""
    nb, ho, wo, co = z1_ref.shape
    m = nb * ho * wo

    scale, shift = _bn_scale_shift(stats1_ref, g_ref, b_ref, count)
    y1 = jnp.maximum(z1_ref[...].reshape(m, co) * scale + shift, 0.0)   # f32 VPU math

    _fill_padded(pad_ref, y1.reshape(nb, ho, wo, co))
    _im2col(col_ref, pad_ref, ho, wo, co, 1)

    z2 = jnp.dot(col_ref[...].reshape(m, 9 * co), w_ref[...],
                 preferred_element_type=jnp.float32)
    z2_ref[...] = z2.reshape(nb, ho, wo, co)
    _store_partial_stats(stats2_ref, z2)


def _bn_add_relu_kernel(z_ref, stats_ref, g_ref, b_ref, *rest, count, has_residual):
    """BN2 + optional residual add (option-A shortcut) + ReLU2."""
    if has_residual:
        res_ref, out_ref = rest
    else:
        (out_ref,) = rest
    nb, ho, wo, co = out_ref.shape
    m = nb * ho * wo

    scale, shift = _bn_scale_shift(stats_ref, g_ref, b_ref, count)
    y = z_ref[...].reshape(m, co) * scale + shift
    if has_residual:
        y = y + res_ref[...].reshape(m, co).astype(jnp.float32)
    out_ref[...] = jnp.maximum(y, 0.0).reshape(nb, ho, wo, co).astype(out_ref.dtype)


# ---------------------------------------------------------------------------
# pallas_call wrappers (grid over batch tiles, all "parallel" -> both TCs on v7x)
# ---------------------------------------------------------------------------
def _compiler_params():
    return pltpu.CompilerParams(
        dimension_semantics=("parallel",),
        vmem_limit_bytes=_VMEM_LIMIT_BYTES)


def _conv1_layer(x, w_col, stride, nb):
    n, h, w, ci = x.shape
    co = w_col.shape[-1]
    ho = (h + 2 - 3) // stride + 1
    wo = (w + 2 - 3) // stride + 1
    nt = n // nb
    return pl.pallas_call(
        functools.partial(_conv_stats_kernel, stride=stride),
        grid=(nt,),
        in_specs=[
            pl.BlockSpec((nb, h, w, ci), lambda i: (i, 0, 0, 0)),
            pl.BlockSpec((9 * ci, co), lambda i: (0, 0)),
        ],
        out_specs=(
            pl.BlockSpec((nb, ho, wo, co), lambda i: (i, 0, 0, 0)),
            pl.BlockSpec((1, 2, co), lambda i: (i, 0, 0)),
        ),
        out_shape=(
            jax.ShapeDtypeStruct((n, ho, wo, co), jnp.float32),   # pre-BN conv1 output
            jax.ShapeDtypeStruct((nt, 2, co), jnp.float32),       # per-tile sum / sumsq
        ),
        scratch_shapes=[
            pltpu.VMEM((nb, h + 2, w + 2, ci), jnp.float32),      # in-VMEM halo
            pltpu.VMEM((nb, ho, wo, 9 * ci), jnp.bfloat16),       # im2col staging
        ],
        compiler_params=_compiler_params(),
    )(x, w_col)


def _conv2_layer(z1, stats1, g1, b1, w_col, nb, count):
    n, ho, wo, co = z1.shape
    nt = n // nb
    return pl.pallas_call(
        functools.partial(_bn_relu_conv_stats_kernel, count=count),
        grid=(nt,),
        in_specs=[
            pl.BlockSpec((nb, ho, wo, co), lambda i: (i, 0, 0, 0)),
            pl.BlockSpec((nt, 2, co), lambda i: (0, 0, 0)),
            pl.BlockSpec((1, co), lambda i: (0, 0)),
            pl.BlockSpec((1, co), lambda i: (0, 0)),
            pl.BlockSpec((9 * co, co), lambda i: (0, 0)),
        ],
        out_specs=(
            pl.BlockSpec((nb, ho, wo, co), lambda i: (i, 0, 0, 0)),
            pl.BlockSpec((1, 2, co), lambda i: (i, 0, 0)),
        ),
        out_shape=(
            jax.ShapeDtypeStruct((n, ho, wo, co), jnp.float32),
            jax.ShapeDtypeStruct((nt, 2, co), jnp.float32),
        ),
        scratch_shapes=[
            pltpu.VMEM((nb, ho + 2, wo + 2, co), jnp.float32),
            pltpu.VMEM((nb, ho, wo, 9 * co), jnp.bfloat16),
        ],
        compiler_params=_compiler_params(),
    )(z1, stats1, g1, b1, w_col)


def _bn_relu_layer(z, stats, g, b, res, nb, count, out_dtype):
    n, ho, wo, co = z.shape
    nt = n // nb
    has_residual = res is not None
    in_specs = [
        pl.BlockSpec((nb, ho, wo, co), lambda i: (i, 0, 0, 0)),
        pl.BlockSpec((nt, 2, co), lambda i: (0, 0, 0)),
        pl.BlockSpec((1, co), lambda i: (0, 0)),
        pl.BlockSpec((1, co), lambda i: (0, 0)),
    ]
    args = [z, stats, g, b]
    if has_residual:
        in_specs.append(pl.BlockSpec((nb, ho, wo, co), lambda i: (i, 0, 0, 0)))
        args.append(res)
    return pl.pallas_call(
        functools.partial(_bn_add_relu_kernel, count=count, has_residual=has_residual),
        grid=(nt,),
        in_specs=in_specs,
        out_specs=pl.BlockSpec((nb, ho, wo, co), lambda i: (i, 0, 0, 0)),
        out_shape=jax.ShapeDtypeStruct((n, ho, wo, co), out_dtype),
        compiler_params=_compiler_params(),
    )(*args)


def _pick_batch_tile(n, per_sample_bytes, budget=_TILE_BUDGET_BYTES):
    """Largest batch tile that (a) divides N, (b) fits a per-tile VMEM budget sized so
    double-buffered blocks stay well inside the 32 MiB scoped limit (v7x has only
    64 MiB physical VMEM), and (c) leaves >=2 grid steps for pipelining / megacore."""
    nb = 1
    for cand in range(1, n + 1):
        if n % cand:
            continue
        if cand * per_sample_bytes > budget:
            break
        if n // cand >= min(n, 2):
            nb = cand
    return nb


# ---------------------------------------------------------------------------
# Parameters + public forward
# ---------------------------------------------------------------------------
def init_block_params(key, out_channels, stride=1):
    """Deterministic parameter init matching the PyTorch Block.__init__."""
    in_channels = out_channels // stride
    k1, k2 = jax.random.split(key)
    # kaiming_normal_(mode='fan_out', nonlinearity='relu'): std = sqrt(2 / (Co * k * k))
    std = (2.0 / (out_channels * 3 * 3)) ** 0.5
    w1 = std * jax.random.normal(k1, (3, 3, in_channels, out_channels), jnp.float32)   # HWIO
    w2 = std * jax.random.normal(k2, (3, 3, out_channels, out_channels), jnp.float32)  # HWIO
    ones = jnp.ones((out_channels,), jnp.float32)
    zeros = jnp.zeros((out_channels,), jnp.float32)
    return dict(w1=w1, g1=ones, b1=zeros, w2=w2, g2=ones, b2=zeros)


def block_forward(x_nchw, params, stride=1, skip_connections=False):
    x = jnp.transpose(x_nchw, (0, 2, 3, 1))                # NCHW -> NHWC (glue)
    n, h, w, ci = x.shape
    co = params["w1"].shape[-1]
    ho = (h + 2 - 3) // stride + 1
    wo = (w + 2 - 3) // stride + 1

    # Conv weights -> im2col layout, cast once to bf16 for the MXU (f32 accumulation
    # stays inside the kernels).
    w1_col = params["w1"].reshape(9 * ci, co).astype(jnp.bfloat16)
    w2_col = params["w2"].reshape(9 * co, co).astype(jnp.bfloat16)
    g1 = params["g1"].reshape(1, co).astype(jnp.float32)
    b1 = params["b1"].reshape(1, co).astype(jnp.float32)
    g2 = params["g2"].reshape(1, co).astype(jnp.float32)
    b2 = params["b2"].reshape(1, co).astype(jnp.float32)

    # Rough per-sample VMEM footprint: z in/out (f32), halo (f32), im2col (bf16), x2 buffering.
    per_sample = ho * wo * co * 48
    nb = _pick_batch_tile(n, per_sample)
    count = n * ho * wo                                    # biased batch-stat count

    z1, stats1 = _conv1_layer(x, w1_col, stride, nb)
    z2, stats2 = _conv2_layer(z1, stats1, g1, b1, w2_col, nb, count)

    res = None
    if skip_connections:
        if stride == 1 and ci == co:
            res = x                                        # identity shortcut, re-read in-kernel
        else:
            # Option-A shortcut (glue): AvgPool2d(kernel_size=1, stride=2) == strided
            # subsample, then zero-pad the channel dim to Co.
            sub = x[:, ::2, ::2, :]
            res = jnp.concatenate([sub, jnp.zeros_like(sub)], axis=-1)

    y = _bn_relu_layer(z2, stats2, g2, b2, res, nb, count, x.dtype)
    return jnp.transpose(y, (0, 3, 1, 2))                  # NHWC -> NCHW (glue)


if __name__ == "__main__":
    key = jax.random.PRNGKey(0)
    kx, kp = jax.random.split(key)

    out_channels, stride = 4, 1
    # PyTorch conv input is NCHW: (batch=2, in_channels=out_channels/stride, 16, 16)
    x = jax.random.normal(kx, (2, out_channels // stride, 16, 16), jnp.float32)
    params = init_block_params(kp, out_channels, stride=stride)

    out = block_forward(x, params, stride=stride, skip_connections=False)
    out = jax.block_until_ready(out)
    assert out.shape == (2, out_channels, 16, 16)
    assert bool(jnp.all(out >= 0.0))                       # final ReLU

    # Also exercise the residual (identity shortcut) specialization.
    out_skip = block_forward(x, params, stride=stride, skip_connections=True)
    out_skip = jax.block_until_ready(out_skip)
    assert out_skip.shape == (2, out_channels, 16, 16)
    assert bool(jnp.all(out_skip >= 0.0))

    print("KERNEL_OK")
</pallas_src>

<mosaic_0001>
module attributes {stable_mosaic.version = 11 : i64} {
  func.func @_conv_stats_kernel(%arg0: i32, %arg1: memref<1x16x16x4xf32, #tpu.memory_space<vmem>>, %arg2: memref<36x4xbf16, #tpu.memory_space<vmem>>, %arg3: memref<1x16x16x4xf32, #tpu.memory_space<vmem>>, %arg4: memref<1x2x4xf32, #tpu.memory_space<vmem>>, %arg5: memref<1x18x18x4xf32, #tpu.memory_space<vmem>>, %arg6: memref<1x16x16x36xbf16, #tpu.memory_space<vmem>>) attributes {dimension_semantics = [#tpu.dimension_semantics<parallel>], iteration_bounds = array<i64: 2>, scalar_prefetch = 0 : i64, scratch_operands = 2 : i64, tpu.core_type = #tpu.core_type<tc>, window_params = [{transform_indices = @transform_0, window_bounds = array<i64: 1, 16, 16, 4>}, {pipeline_mode = #tpu.pipeline_mode<synchronous>, transform_indices = @transform_1, window_bounds = array<i64: 36, 4>}, {transform_indices = @transform_2, window_bounds = array<i64: 1, 16, 16, 4>}, {transform_indices = @transform_3, window_bounds = array<i64: 1, 2, 4>}]} {
    %c0 = arith.constant 0 : index
    %c0_0 = arith.constant 0 : index
    %c0_1 = arith.constant 0 : index
    %c0_2 = arith.constant 0 : index
    %0 = vector.load %arg1[%c0, %c0_0, %c0_1, %c0_2] : memref<1x16x16x4xf32, #tpu.memory_space<vmem>>, vector<1x16x16x4xf32>
    %cst = arith.constant 0.000000e+00 : f32
    %1 = vector.broadcast %cst : f32 to vector<1x18x18x4xf32>
    %c0_3 = arith.constant 0 : index
    %c0_4 = arith.constant 0 : index
    %c0_5 = arith.constant 0 : index
    %c0_6 = arith.constant 0 : index
    %2 = vector.load %arg5[%c0_3, %c0_4, %c0_5, %c0_6] : memref<1x18x18x4xf32, #tpu.memory_space<vmem>>, vector<1x18x18x4xf32>
    tpu.vector_store %arg5[%c0_3, %c0_4, %c0_5, %c0_6], %1 {strides = array<i32>} : memref<1x18x18x4xf32, #tpu.memory_space<vmem>>, vector<1x18x18x4xf32>,
    %c0_7 = arith.constant 0 : index
    %c1 = arith.constant 1 : index
    %c1_8 = arith.constant 1 : index
    %c0_9 = arith.constant 0 : index
    %3 = vector.load %arg5[%c0_7, %c1, %c1_8, %c0_9] : memref<1x18x18x4xf32, #tpu.memory_space<vmem>>, vector<1x16x16x4xf32>
    tpu.vector_store %arg5[%c0_7, %c1, %c1_8, %c0_9], %0 {strides = array<i32>} : memref<1x18x18x4xf32, #tpu.memory_space<vmem>>, vector<1x16x16x4xf32>,
    %c0_10 = arith.constant 0 : index
    %c0_11 = arith.constant 0 : index
    %c0_12 = arith.constant 0 : index
    %c0_13 = arith.constant 0 : index
    %4 = vector.load %arg5[%c0_10, %c0_11, %c0_12, %c0_13] : memref<1x18x18x4xf32, #tpu.memory_space<vmem>>, vector<1x16x16x4xf32>
    %5 = arith.truncf %4 : vector<1x16x16x4xf32> to vector<1x16x16x4xbf16>
    %c0_14 = arith.constant 0 : index
    %c0_15 = arith.constant 0 : index
    %c0_16 = arith.constant 0 : index
    %c0_17 = arith.constant 0 : index
    %6 = vector.load %arg6[%c0_14, %c0_15, %c0_16, %c0_17] : memref<1x16x16x36xbf16, #tpu.memory_space<vmem>>, vector<1x16x16x4xbf16>
    tpu.vector_store %arg6[%c0_14, %c0_15, %c0_16, %c0_17], %5 {strides = array<i32>} : memref<1x16x16x36xbf16, #tpu.memory_space<vmem>>, vector<1x16x16x4xbf16>,
    %c0_18 = arith.constant 0 : index
    %c0_19 = arith.constant 0 : index
    %c1_20 = arith.constant 1 : index
    %c0_21 = arith.constant 0 : index
    %7 = vector.load %arg5[%c0_18, %c0_19, %c1_20, %c0_21] : memref<1x18x18x4xf32, #tpu.memory_space<vmem>>, vector<1x16x16x4xf32>
    %8 = arith.truncf %7 : vector<1x16x16x4xf32> to vector<1x16x16x4xbf16>
    %c0_22 = arith.constant 0 : index
    %c0_23 = arith.constant 0 : index
    %c0_24 = arith.constant 0 : index
    %c4 = arith.constant 4 : index
    %9 = vector.load %arg6[%c0_22, %c0_23, %c0_24, %c4] : memref<1x16x16x36xbf16, #tpu.memory_space<vmem>>, vector<1x16x16x4xbf16>
    tpu.vector_store %arg6[%c0_22, %c0_23, %c0_24, %c4], %8 {strides = array<i32>} : memref<1x16x16x36xbf16, #tpu.memory_space<vmem>>, vector<1x16x16x4xbf16>,
    %c0_25 = arith.constant 0 : index
    %c0_26 = arith.constant 0 : index
    %c2 = arith.constant 2 : index
    %c0_27 = arith.constant 0 : index
    %10 = vector.load %arg5[%c0_25, %c0_26, %c2, %c0_27] : memref<1x18x18x4xf32, #tpu.memory_space<vmem>>, vector<1x16x16x4xf32>
    %11 = arith.truncf %10 : vector<1x16x16x4xf32> to vector<1x16x16x4xbf16>
    %c0_28 = arith.constant 0 : index
    %c0_29 = arith.constant 0 : index
    %c0_30 = arith.constant 0 : index
    %c8 = arith.constant 8 : index
    %12 = vector.load %arg6[%c0_28, %c0_29, %c0_30, %c8] : memref<1x16x16x36xbf16, #tpu.memory_space<vmem>>, vector<1x16x16x4xbf16>
    tpu.vector_store %arg6[%c0_28, %c0_29, %c0_30, %c8], %11 {strides = array<i32>} : memref<1x16x16x36xbf16, #tpu.memory_space<vmem>>, vector<1x16x16x4xbf16>,
    %c0_31 = arith.constant 0 : index
    %c1_32 = arith.constant 1 : index
    %c0_33 = arith.constant 0 : index
    %c0_34 = arith.constant 0 : index
    %13 = vector.load %arg5[%c0_31, %c1_32, %c0_33, %c0_34] : memref<1x18x18x4xf32, #tpu.memory_space<vmem>>, vector<1x16x16x4xf32>
    %14 = arith.truncf %13 : vector<1x16x16x4xf32> to vector<1x16x16x4xbf16>
    %c0_35 = arith.constant 0 : index
    %c0_36 = arith.constant 0 : index
    %c0_37 = arith.constant 0 : index
    %c12 = arith.constant 12 : index
    %15 = vector.load %arg6[%c0_35, %c0_36, %c0_37, %c12] : memref<1x16x16x36xbf16, #tpu.memory_space<vmem>>, vector<1x16x16x4xbf16>
    tpu.vector_store %arg6[%c0_35, %c0_36, %c0_37, %c12], %14 {strides = array<i32>} : memref<1x16x16x36xbf16, #tpu.memory_space<vmem>>, vector<1x16x16x4xbf16>,
    %c0_38 = arith.constant 0 : index
    %c1_39 = arith.constant 1 : index
    %c1_40 = arith.constant 1 : index
    %c0_41 = arith.constant 0 : index
    %16 = vector.load %arg5[%c0_38, %c1_39, %c1_40, %c0_41] : memref<1x18x18x4xf32, #tpu.memory_space<vmem>>, vector<1x16x16x4xf32>
    %17 = arith.truncf %16 : vector<1x16x16x4xf32> to vector<1x16x16x4xbf16>
    %c0_42 = arith.constant 0 : index
    %c0_43 = arith.constant 0 : index
    %c0_44 = arith.constant 0 : index
    %c16 = arith.constant 16 : index
    %18 = vector.load %arg6[%c0_42, %c0_43, %c0_44, %c16] : memref<1x16x16x36xbf16, #tpu.memory_space<vmem>>, vector<1x16x16x4xbf16>
    tpu.vector_store %arg6[%c0_42, %c0_43, %c0_44, %c16], %17 {strides = array<i32>} : memref<1x16x16x36xbf16, #tpu.memory_space<vmem>>, vector<1x16x16x4xbf16>,
    %c0_45 = arith.constant 0 : index
    %c1_46 = arith.constant 1 : index
    %c2_47 = arith.constant 2 : index
    %c0_48 = arith.constant 0 : index
    %19 = vector.load %arg5[%c0_45, %c1_46, %c2_47, %c0_48] : memref<1x18x18x4xf32, #tpu.memory_space<vmem>>, vector<1x16x16x4xf32>
    %20 = arith.truncf %19 : vector<1x16x16x4xf32> to vector<1x16x16x4xbf16>
    %c0_49 = arith.constant 0 : index
    %c0_50 = arith.constant 0 : index
    %c0_51 = arith.constant 0 : index
    %c20 = arith.constant 20 : index
    %21 = vector.load %arg6[%c0_49, %c0_50, %c0_51, %c20] : memref<1x16x16x36xbf16, #tpu.memory_space<vmem>>, vector<1x16x16x4xbf16>
    tpu.vector_store %arg6[%c0_49, %c0_50, %c0_51, %c20], %20 {strides = array<i32>} : memref<1x16x16x36xbf16, #tpu.memory_space<vmem>>, vector<1x16x16x4xbf16>,
    %c0_52 = arith.constant 0 : index
    %c2_53 = arith.constant 2 : index
    %c0_54 = arith.constant 0 : index
    %c0_55 = arith.constant 0 : index
    %22 = vector.load %arg5[%c0_52, %c2_53, %c0_54, %c0_55] : memref<1x18x18x4xf32, #tpu.memory_space<vmem>>, vector<1x16x16x4xf32>
    %23 = arith.truncf %22 : vector<1x16x16x4xf32> to vector<1x16x16x4xbf16>
    %c0_56 = arith.constant 0 : index
    %c0_57 = arith.constant 0 : index
    %c0_58 = arith.constant 0 : index
    %c24 = arith.constant 24 : index
    %24 = vector.load %arg6[%c0_56, %c0_57, %c0_58, %c24] : memref<1x16x16x36xbf16, #tpu.memory_space<vmem>>, vector<1x16x16x4xbf16>
    tpu.vector_store %arg6[%c0_56, %c0_57, %c0_58, %c24], %23 {strides = array<i32>} : memref<1x16x16x36xbf16, #tpu.memory_space<vmem>>, vector<1x16x16x4xbf16>,
    %c0_59 = arith.constant 0 : index
    %c2_60 = arith.constant 2 : index
    %c1_61 = arith.constant 1 : index
    %c0_62 = arith.constant 0 : index
    %25 = vector.load %arg5[%c0_59, %c2_60, %c1_61, %c0_62] : memref<1x18x18x4xf32, #tpu.memory_space<vmem>>, vector<1x16x16x4xf32>
    %26 = arith.truncf %25 : vector<1x16x16x4xf32> to vector<1x16x16x4xbf16>
    %c0_63 = arith.constant 0 : index
    %c0_64 = arith.constant 0 : index
    %c0_65 = arith.constant 0 : index
    %c28 = arith.constant 28 : index
    %27 = vector.load %arg6[%c0_63, %c0_64, %c0_65, %c28] : memref<1x16x16x36xbf16, #tpu.memory_space<vmem>>, vector<1x16x16x4xbf16>
    tpu.vector_store %arg6[%c0_63, %c0_64, %c0_65, %c28], %26 {strides = array<i32>} : memref<1x16x16x36xbf16, #tpu.memory_space<vmem>>, vector<1x16x16x4xbf16>,
    %c0_66 = arith.constant 0 : index
    %c2_67 = arith.constant 2 : index
    %c2_68 = arith.constant 2 : index
    %c0_69 = arith.constant 0 : index
    %28 = vector.load %arg5[%c0_66, %c2_67, %c2_68, %c0_69] : memref<1x18x18x4xf32, #tpu.memory_space<vmem>>, vector<1x16x16x4xf32>
    %29 = arith.truncf %28 : vector<1x16x16x4xf32> to vector<1x16x16x4xbf16>
    %c0_70 = arith.constant 0 : index
    %c0_71 = arith.constant 0 : index
    %c0_72 = arith.constant 0 : index
    %c32 = arith.constant 32 : index
    %30 = vector.load %arg6[%c0_70, %c0_71, %c0_72, %c32] : memref<1x16x16x36xbf16, #tpu.memory_space<vmem>>, vector<1x16x16x4xbf16>
    tpu.vector_store %arg6[%c0_70, %c0_71, %c0_72, %c32], %29 {strides = array<i32>} : memref<1x16x16x36xbf16, #tpu.memory_space<vmem>>, vector<1x16x16x4xbf16>,
    %c0_73 = arith.constant 0 : index
    %c0_74 = arith.constant 0 : index
    %c0_75 = arith.constant 0 : index
    %c0_76 = arith.constant 0 : index
    %31 = vector.load %arg6[%c0_73, %c0_74, %c0_75, %c0_76] : memref<1x16x16x36xbf16, #tpu.memory_space<vmem>>, vector<1x16x16x36xbf16>
    %32 = vector.shape_cast %31 : vector<1x16x16x36xbf16> to vector<256x36xbf16>
    %c0_77 = arith.constant 0 : index
    %c0_78 = arith.constant 0 : index
    %33 = vector.load %arg2[%c0_77, %c0_78] : memref<36x4xbf16, #tpu.memory_space<vmem>>, vector<36x4xbf16>
    %cst_79 = arith.constant dense<0.000000e+00> : vector<256x4xf32>
    %34 = tpu.matmul %32, %33, %cst_79 {dimension_numbers = #tpu.dot_dimension_numbers<[1], [0], [0], [1], [0, 0, 1, 1], [], []>} : vector<256x36xbf16>, vector<36x4xbf16>, vector<256x4xf32> -> vector<256x4xf32>
    %35 = vector.shape_cast %34 : vector<256x4xf32> to vector<1x16x16x4xf32>
    %c0_80 = arith.constant 0 : index
    %c0_81 = arith.constant 0 : index
    %c0_82 = arith.constant 0 : index
    %c0_83 = arith.constant 0 : index
    %36 = vector.load %arg3[%c0_80, %c0_81, %c0_82, %c0_83] : memref<1x16x16x4xf32, #tpu.memory_space<vmem>>, vector<1x16x16x4xf32>
    tpu.vector_store %arg3[%c0_80, %c0_81, %c0_82, %c0_83], %35 {strides = array<i32>} : memref<1x16x16x4xf32, #tpu.memory_space<vmem>>, vector<1x16x16x4xf32>,
    %cst_84 = arith.constant dense<0.000000e+00> : vector<4xf32>
    %37 = vector.multi_reduction <add>, %34, %cst_84 [0] : vector<256x4xf32> to vector<4xf32>
    %38 = vector.shape_cast %37 : vector<4xf32> to vector<1x4xf32>
    %39 = vector.shape_cast %38 : vector<1x4xf32> to vector<1x1x4xf32>
    %c0_85 = arith.constant 0 : index
    %c0_86 = arith.constant 0 : index
    %c0_87 = arith.constant 0 : index
    %40 = vector.load %arg4[%c0_85, %c0_86, %c0_87] : memref<1x2x4xf32, #tpu.memory_space<vmem>>, vector<1x1x4xf32>
    tpu.vector_store %arg4[%c0_85, %c0_86, %c0_87], %39 {strides = array<i32>} : memref<1x2x4xf32, #tpu.memory_space<vmem>>, vector<1x1x4xf32>,
    %41 = arith.mulf %34, %34 : vector<256x4xf32>
    %cst_88 = arith.constant dense<0.000000e+00> : vector<4xf32>
    %42 = vector.multi_reduction <add>, %41, %cst_88 [0] : vector<256x4xf32> to vector<4xf32>
    %43 = vector.shape_cast %42 : vector<4xf32> to vector<1x4xf32>
    %44 = vector.shape_cast %43 : vector<1x4xf32> to vector<1x1x4xf32>
    %c0_89 = arith.constant 0 : index
    %c1_90 = arith.constant 1 : index
    %c0_91 = arith.constant 0 : index
    %45 = vector.load %arg4[%c0_89, %c1_90, %c0_91] : memref<1x2x4xf32, #tpu.memory_space<vmem>>, vector<1x1x4xf32>
    tpu.vector_store %arg4[%c0_89, %c1_90, %c0_91], %44 {strides = array<i32>} : memref<1x2x4xf32, #tpu.memory_space<vmem>>, vector<1x1x4xf32>,
    return
  }
  func.func @transform_0(%arg0: i32) -> (i32, i32, i32, i32) {
    %c0_i32 = arith.constant 0 : i32
    %c0_i32_0 = arith.constant 0 : i32
    %c0_i32_1 = arith.constant 0 : i32
    %c0_i32_2 = arith.constant 0 : i32
    return %arg0, %c0_i32, %c0_i32_0, %c0_i32_1 : i32, i32, i32, i32
  }
  func.func @transform_1(%arg0: i32) -> (i32, i32) {
    %c0_i32 = arith.constant 0 : i32
    %c0_i32_0 = arith.constant 0 : i32
    %c0_i32_1 = arith.constant 0 : i32
    return %c0_i32, %c0_i32_0 : i32, i32
  }
  func.func @transform_2(%arg0: i32) -> (i32, i32, i32, i32) {
    %c0_i32 = arith.constant 0 : i32
    %c0_i32_0 = arith.constant 0 : i32
    %c0_i32_1 = arith.constant 0 : i32
    %c0_i32_2 = arith.constant 0 : i32
    return %arg0, %c0_i32, %c0_i32_0, %c0_i32_1 : i32, i32, i32, i32
  }
  func.func @transform_3(%arg0: i32) -> (i32, i32, i32) {
    %c0_i32 = arith.constant 0 : i32
    %c0_i32_0 = arith.constant 0 : i32
    %c0_i32_1 = arith.constant 0 : i32
    return %arg0, %c0_i32, %c0_i32_0 : i32, i32, i32
  }
}

</mosaic_0001>

<llo_original>
// kernel: tpu_custom_call.1
$region0: #{tpu_custom_call.1}
  #allocation0 [shape = 'u32[]', space=smem, size = 0x4, offset = 0x4, fixed_abs, tag = 'smem constant byte address 0x4 - core index']
  #allocation1 [shape = 'u32[72,128]{1,0:T(1,128)}', space=vmem, size = 0x9000, scoped, tag = 'internal scratch']
  #allocation2 [shape = 'f32[1,18,18,4]{3,2,1,0:T(8,128)}', space=vmem, size = 0x36000, scoped, tag = 'scratch operand']
  #allocation3 [shape = 'bf16[1,16,16,36]{3,2,1,0:T(8,128)(2,1)}', space=vmem, size = 0x10000, scoped, tag = 'scratch operand']
  %s0 = inlined_call_operand.vmem [shape: f32[2,16,16,4], index: 0, kind: input, shape index: {}]
  %s1 = inlined_call_operand.vmem [shape: bf16[36,4], index: 1, kind: input, shape index: {}]
  %s2 = inlined_call_operand.vmem [shape: f32[2,16,16,4], index: 2, kind: output, shape index: {0}]
  %s3 = inlined_call_operand.hbm [shape: f32[2,2,4], index: 3, kind: output, shape index: {1}]
  %4 = xla_tuple %s2, %s3
  %s5 = sld [smem:[#allocation0]]
  $region49: #{tpu_custom_call.1} parent=0
    _
  %s7 = ssub.s32 1, %s5
  %s8 = scalar_select 0, %s7, %s5
  $region1: #{tpu_custom_call.1} parent=0
    #allocation4 [shape = 'u8[2048]{0}', space=vmem, size = 0x800, scoped, tag = 'output window, operand 1']
    #allocation5 [shape = 's32[2]{0}', space=sflag, size = 0x8, scoped, tag = 'scoped memory for tpu_custom_call.1']
    %9 = vsyncpa [#allocation5], 0
    %s10 = scalar_lea.sflag [#allocation5], 1
    %11 = vsyncpa %s10, 0
    loop: start=0, step=1, limit=4
    $region2: #{tpu_custom_call.1} parent=1 // loop_pre_header
      _
    $region3: #{tpu_custom_call.1} parent=1 // loop_header
      %s13 = sphi 0, %s17
      %p14 = scmp.ge.s32.totalorder %s13, 4
      %s23 = sphi 0, %s25
      %s26 = sphi 0, %s23
      %s27 = sphi 0, %s26
      %s43 = sphi 0, %s27
      %s47 = sphi 0, %s47
      %s49 = sphi 0, %s47
      %s50 = sphi 0, %s49
      %s64 = sphi 0, %s50
      %s70 = sphi 0, %s72
      %s73 = sphi 0, %s70
      %s74 = sphi 0, %s73
      %s90 = sphi 0, %s74
      %s96 = sphi 0, %s98
      %s99 = sphi 0, %s96
      %s100 = sphi 0, %s99
      %s116 = sphi 0, %s100
    $region4: #{tpu_custom_call.1} parent=1 // loop_header_branch
      %16 = sbr.rel (%p14) target = $region8
    $region5: #{tpu_custom_call.1} parent=1 // loop_body
      %s18 = ssub.s32 %s13, 1
      %s19 = ssub.s32 %s13, 2
      %s20 = sadd.s32 %s13, 1
      %s21 = ssub.s32 %s13, %s20
      %p22 = scmp.eq.s32.totalorder %s21, 0
      %s24 = sadd.s32 %s23, 1
      %s25 = scalar_select %p22, %s23, %s24
      %p28 = pneg %p22
      %p29 = scmp.eq.s32.totalorder %s13, 1
      %p30 = por %p28, %p29
      %p31 = scmp.ne.s32.totalorder %s23, %s26
      %p32 = scmp.eq.s32.totalorder %s13, 0
      %p33 = por %p31, %p32
      %p34 = scmp.ne.s32.totalorder %s23, %s26
      %p35 = scmp.eq.s32.totalorder %s18, 1
      %p36 = por %p34, %p35
      %p37 = scmp.ne.s32.totalorder %s26, %s27
      %p38 = scmp.eq.s32.totalorder %s18, 0
      %p39 = por %p37, %p38
      %p40 = scmp.ne.s32.totalorder %s26, %s27
      %p41 = scmp.eq.s32.totalorder %s19, 1
      %p42 = por %p40, %p41
      %p44 = scmp.ne.s32.totalorder %s27, %s43
      %p45 = scmp.eq.s32.totalorder %s19, 0
      %p46 = por %p44, %p45
      %s48 = sadd.s32 %s47, 1
      %p51 = scmp.eq.s32.totalorder %s13, 1
      %p52 = scmp.ne.s32.totalorder %s47, %s49
      %p53 = scmp.eq.s32.totalorder %s13, 0
      %p54 = por %p52, %p53
      %p55 = scmp.ne.s32.totalorder %s47, %s49
      %p56 = scmp.eq.s32.totalorder %s18, 1
      %p57 = por %p55, %p56
      %p58 = scmp.ne.s32.totalorder %s49, %s50
      %p59 = scmp.eq.s32.totalorder %s18, 0
      %p60 = por %p58, %p59
      %p61 = scmp.ne.s32.totalorder %s49, %s50
      %p62 = scmp.eq.s32.totalorder %s19, 1
      %p63 = por %p61, %p62
      %p65 = scmp.ne.s32.totalorder %s50, %s64
      %p66 = scmp.eq.s32.totalorder %s19, 0
      %p67 = por %p65, %p66
      %s68 = ssub.s32 %s13, %s20
      %p69 = scmp.eq.s32.totalorder %s68, 0
      %s71 = sadd.s32 %s70, 1
      %s72 = scalar_select %p69, %s70, %s71
      %p75 = pneg %p69
      %p76 = scmp.eq.s32.totalorder %s13, 1
      %p77 = por %p75, %p76
      %p78 = scmp.ne.s32.totalorder %s70, %s73
      %p79 = scmp.eq.s32.totalorder %s13, 0
      %p80 = por %p78, %p79
      %p81 = scmp.ne.s32.totalorder %s70, %s73
      %p82 = scmp.eq.s32.totalorder %s18, 1
      %p83 = por %p81, %p82
      %p84 = scmp.ne.s32.totalorder %s73, %s74
      %p85 = scmp.eq.s32.totalorder %s18, 0
      %p86 = por %p84, %p85
      %p87 = scmp.ne.s32.totalorder %s73, %s74
      %p88 = scmp.eq.s32.totalorder %s19, 1
      %p89 = por %p87, %p88
      %p91 = scmp.ne.s32.totalorder %s74, %s90
      %p92 = scmp.eq.s32.totalorder %s19, 0
      %p93 = por %p91, %p92
      %s94 = ssub.s32 %s13, %s20
      %p95 = scmp.eq.s32.totalorder %s94, 0
      %s97 = sadd.s32 %s96, 1
      %s98 = scalar_select %p95, %s96, %s97
      %p101 = pneg %p95
      %p102 = scmp.eq.s32.totalorder %s13, 1
      %p103 = por %p101, %p102
      %p104 = scmp.ne.s32.totalorder %s96, %s99
      %p105 = scmp.eq.s32.totalorder %s13, 0
      %p106 = por %p104, %p105
      %p107 = scmp.ne.s32.totalorder %s96, %s99
      %p108 = scmp.eq.s32.totalorder %s18, 1
      %p109 = por %p107, %p108
      %p110 = scmp.ne.s32.totalorder %s99, %s100
      %p111 = scmp.eq.s32.totalorder %s18, 0
      %p112 = por %p110, %p111
      %p113 = scmp.ne.s32.totalorder %s99, %s100
      %p114 = scmp.eq.s32.totalorder %s19, 1
      %p115 = por %p113, %p114
      %p117 = scmp.ne.s32.totalorder %s100, %s116
      %p118 = scmp.eq.s32.totalorder %s19, 0
      %p119 = por %p117, %p118
      %p120 = scmp.le.s32.totalorder 1, %s13
      %p121 = scmp.lt.s32.totalorder %s13, 3
      %p122 = pnand %p120, %p121
      %p123 = pneg %p122
      // Predicated region
      $region9: #{tpu_custom_call.1} parent=5 // pred_check
        _
      $region10: #{tpu_custom_call.1} parent=5 // pred_check_branch
        %125 = sbr.rel (%p122) target = $region12
      $region11: #{tpu_custom_call.1} parent=5 // pred_region
        %s126 = ssub.s32 %s13, 1
        // Predicated region
        $region13: #{tpu_custom_call.1} parent=11 // pred_check
          %p127 = pneg %p60
        $region14: #{tpu_custom_call.1} parent=11 // pred_check_branch
          %129 = sbr.rel (%p127) target = $region16
        $region15: #{tpu_custom_call.1} parent=11 // pred_region
          _
        $region16: #{tpu_custom_call.1} parent=11 // pred_fallthru
          _
      $region12: #{tpu_custom_call.1} parent=5 // pred_fallthru
        _
      %p130 = scmp.lt.s32.totalorder %s13, 2
      // Predicated region
      $region17: #{tpu_custom_call.1} parent=5 // pred_check
        %p131 = pneg %p130
      $region18: #{tpu_custom_call.1} parent=5 // pred_check_branch
        %133 = sbr.rel (%p131) target = $region20
      $region19: #{tpu_custom_call.1} parent=5 // pred_region
        // Predicated region
        $region21: #{tpu_custom_call.1} parent=19 // pred_check
          %p134 = pneg %p33
        $region22: #{tpu_custom_call.1} parent=19 // pred_check_branch
          %136 = sbr.rel (%p134) target = $region24
        $region23: #{tpu_custom_call.1} parent=19 // pred_region
          %p137 = scmp.lt.s32.totalorder %s13, 1
          %s138 = scalar_select %p137, %s13, 1
          %s139 = smul.addr %s138, 32
          %s140 = smul.addr %s139, 8
          %s141 = scalar_lea.vmem %s0, %s140
        $region24: #{tpu_custom_call.1} parent=19 // pred_fallthru
          _
      $region20: #{tpu_custom_call.1} parent=5 // pred_fallthru
        _
      %p142 = scmp.le.s32.totalorder 1, %s13
      %p143 = scmp.lt.s32.totalorder %s13, 3
      %p144 = pnand %p142, %p143
      %p145 = pneg %p144
      // Predicated region
      $region25: #{tpu_custom_call.1} parent=5 // pred_check
        _
      $region26: #{tpu_custom_call.1} parent=5 // pred_check_branch
        %147 = sbr.rel (%p144) target = $region28
      $region27: #{tpu_custom_call.1} parent=5 // pred_region
        %s148 = ssub.s32 %s13, 1
        %p149 = scmp.lt.s32.totalorder %s18, 1
        %s150 = scalar_select %p149, %s18, 1
        %s151 = smul.addr %s150, 32
        %s152 = smul.addr %s151, 8
        %s153 = scalar_lea.vmem %s0, %s152
        %p154 = pneg %p39
        %p155 = pneg %p36
        %p156 = pneg %p60
        %p157 = pneg %p57
        %p158 = pneg %p86
        %p159 = pneg %p83
        %p160 = scmp.lt.s32.totalorder %s18, 1
        %s161 = scalar_select %p160, %s18, 1
        %s162 = smul.addr %s161, 32
        %s163 = smul.addr %s162, 8
        %s164 = scalar_lea.vmem %s2, %s163
        %p165 = pneg %p112
        %p166 = pneg %p109
        %s167 = sand.u32 %s99, 1
        %s168 = scalar_lea.sflag [#allocation5], %s167
        %s169 = sand.u32 %s99, 1
        %s170 = smul.addr %s169, 2
        %s171 = scalar_lea.vmem [#allocation4], %s170
        %p172 = scmp.lt.s32.totalorder %s18, 1
        %s173 = scalar_select %p172, %s18, 1
        %s174 = smul.addr %s173, 32
        %s175 = smul.addr %s174, 8
        %s176 = scalar_lea.vmem %s0, %s175
        %p177 = scmp.lt.s32.totalorder %s18, 1
        %s178 = scalar_select %p177, %s18, 1
        %s179 = smul.addr %s178, 32
        %s180 = smul.addr %s179, 8
        %s181 = scalar_lea.vmem %s2, %s180
        %v183 = vld [vmem:[%s176] sm:$0xff]
        %v184 = vld [vmem:[%s176 + $0x8] sm:$0xff]
        %v185 = vld [vmem:[%s176 + $0x10] sm:$0xff]
        %v186 = vld [vmem:[%s176 + $0x18] sm:$0xff]
        %v187 = vld [vmem:[%s176 + $0x20] sm:$0xff]
        %v188 = vld [vmem:[%s176 + $0x28] sm:$0xff]
        %v189 = vld [vmem:[%s176 + $0x30] sm:$0xff]
        %v190 = vld [vmem:[%s176 + $0x38] sm:$0xff]
        %v191 = vld [vmem:[%s176 + $0x40] sm:$0xff]
        %v192 = vld [vmem:[%s176 + $0x48] sm:$0xff]
        %v193 = vld [vmem:[%s176 + $0x50] sm:$0xff]
        %v194 = vld [vmem:[%s176 + $0x58] sm:$0xff]
        %v195 = vld [vmem:[%s176 + $0x60] sm:$0xff]
        %v196 = vld [vmem:[%s176 + $0x68] sm:$0xff]
        %v197 = vld [vmem:[%s176 + $0x70] sm:$0xff]
        %v198 = vld [vmem:[%s176 + $0x78] sm:$0xff]
        %v199 = vld [vmem:[%s176 + $0x80] sm:$0xff]
        %v200 = vld [vmem:[%s176 + $0x88] sm:$0xff]
        %v201 = vld [vmem:[%s176 + $0x90] sm:$0xff]
        %v202 = vld [vmem:[%s176 + $0x98] sm:$0xff]
        %v203 = vld [vmem:[%s176 + $0xa0] sm:$0xff]
        %v204 = vld [vmem:[%s176 + $0xa8] sm:$0xff]
        %v205 = vld [vmem:[%s176 + $0xb0] sm:$0xff]
        %v206 = vld [vmem:[%s176 + $0xb8] sm:$0xff]
        %v207 = vld [vmem:[%s176 + $0xc0] sm:$0xff]
        %v208 = vld [vmem:[%s176 + $0xc8] sm:$0xff]
        %v209 = vld [vmem:[%s176 + $0xd0] sm:$0xff]
        %v210 = vld [vmem:[%s176 + $0xd8] sm:$0xff]
        %v211 = vld [vmem:[%s176 + $0xe0] sm:$0xff]
        %v212 = vld [vmem:[%s176 + $0xe8] sm:$0xff]
        %v213 = vld [vmem:[%s176 + $0xf0] sm:$0xff]
        %v214 = vld [vmem:[%s176 + $0xf8] sm:$0xff]
        %vm215 = vcmask 31744
        %216 = vst.msk [vmem:[#allocation2] sm:$0xff] %vm215, 0.0
        %217 = vst.msk [vmem:[#allocation2 + $0x8] sm:$0xff] %vm215, 0.0
        %vm218 = vcmask 25600
        %219 = vst.msk [vmem:[#allocation2 + $0x10] sm:$0x3] %vm218, 0.0
        %220 = vst.msk [vmem:[#allocation2 + $0x18] sm:$0xff] %vm215, 0.0
        %221 = vst.msk [vmem:[#allocation2 + $0x20] sm:$0xff] %vm215, 0.0
        %222 = vst.msk [vmem:[#allocation2 + $0x28] sm:$0x3] %vm218, 0.0
        %223 = vst.msk [vmem:[#allocation2 + $0x30] sm:$0xff] %vm215, 0.0
        %224 = vst.msk [vmem:[#allocation2 + $0x38] sm:$0xff] %vm215, 0.0
        %225 = vst.msk [vmem:[#allocation2 + $0x40] sm:$0x3] %vm218, 0.0
        %226 = vst.msk [vmem:[#allocation2 + $0x48] sm:$0xff] %vm215, 0.0
        %227 = vst.msk [vmem:[#allocation2 + $0x50] sm:$0xff] %vm215, 0.0
        %228 = vst.msk [vmem:[#allocation2 + $0x58] sm:$0x3] %vm218, 0.0
        %229 = vst.msk [vmem:[#allocation2 + $0x60] sm:$0xff] %vm215, 0.0
        %230 = vst.msk [vmem:[#allocation2 + $0x68] sm:$0xff] %vm215, 0.0
        %231 = vst.msk [vmem:[#allocation2 + $0x70] sm:$0x3] %vm218, 0.0
        %232 = vst.msk [vmem:[#allocation2 + $0x78] sm:$0xff] %vm215, 0.0
        %233 = vst.msk [vmem:[#allocation2 + $0x80] sm:$0xff] %vm215, 0.0
        %234 = vst.msk [vmem:[#allocation2 + $0x88] sm:$0x3] %vm218, 0.0
        %235 = vst.msk [vmem:[#allocation2 + $0x90] sm:$0xff] %vm215, 0.0
        %236 = vst.msk [vmem:[#allocation2 + $0x98] sm:$0xff] %vm215, 0.0
        %237 = vst.msk [vmem:[#allocation2 + $0xa0] sm:$0x3] %vm218, 0.0
        %238 = vst.msk [vmem:[#allocation2 + $0xa8] sm:$0xff] %vm215, 0.0
        %239 = vst.msk [vmem:[#allocation2 + $0xb0] sm:$0xff] %vm215, 0.0
        %240 = vst.msk [vmem:[#allocation2 + $0xb8] sm:$0x3] %vm218, 0.0
        %241 = vst.msk [vmem:[#allocation2 + $0xc0] sm:$0xff] %vm215, 0.0
        %242 = vst.msk [vmem:[#allocation2 + $0xc8] sm:$0xff] %vm215, 0.0
        %243 = vst.msk [vmem:[#allocation2 + $0xd0] sm:$0x3] %vm218, 0.0
        %244 = vst.msk [vmem:[#allocation2 + $0xd8] sm:$0xff] %vm215, 0.0
        %245 = vst.msk [vmem:[#allocation2 + $0xe0] sm:$0xff] %vm215, 0.0
        %246 = vst.msk [vmem:[#allocation2 + $0xe8] sm:$0x3] %vm218, 0.0
        %247 = vst.msk [vmem:[#allocation2 + $0xf0] sm:$0xff] %vm215, 0.0
        %248 = vst.msk [vmem:[#allocation2 + $0xf8] sm:$0xff] %vm215, 0.0
        %249 = vst.msk [vmem:[#allocation2 + $0x100] sm:$0x3] %vm218, 0.0
        %250 = vst.msk [vmem:[#allocation2 + $0x108] sm:$0xff] %vm215, 0.0
        %251 = vst.msk [vmem:[#allocation2 + $0x110] sm:$0xff] %vm215, 0.0
        %252 = vst.msk [vmem:[#allocation2 + $0x118] sm:$0x3] %vm218, 0.0
        %253 = vst.msk [vmem:[#allocation2 + $0x120] sm:$0xff] %vm215, 0.0
        %254 = vst.msk [vmem:[#allocation2 + $0x128] sm:$0xff] %vm215, 0.0
        %255 = vst.msk [vmem:[#allocation2 + $0x130] sm:$0x3] %vm218, 0.0
        %256 = vst.msk [vmem:[#allocation2 + $0x138] sm:$0xff] %vm215, 0.0
        %257 = vst.msk [vmem:[#allocation2 + $0x140] sm:$0xff] %vm215, 0.0
        %258 = vst.msk [vmem:[#allocation2 + $0x148] sm:$0x3] %vm218, 0.0
        %259 = vst.msk [vmem:[#allocation2 + $0x150] sm:$0xff] %vm215, 0.0
        %260 = vst.msk [vmem:[#allocation2 + $0x158] sm:$0xff] %vm215, 0.0
        %261 = vst.msk [vmem:[#allocation2 + $0x160] sm:$0x3] %vm218, 0.0
        %262 = vst.msk [vmem:[#allocation2 + $0x168] sm:$0xff] %vm215, 0.0
        %263 = vst.msk [vmem:[#allocation2 + $0x170] sm:$0xff] %vm215, 0.0
        %264 = vst.msk [vmem:[#allocation2 + $0x178] sm:$0x3] %vm218, 0.0
        %265 = vst.msk [vmem:[#allocation2 + $0x180] sm:$0xff] %vm215, 0.0
        %266 = vst.msk [vmem:[#allocation2 + $0x188] sm:$0xff] %vm215, 0.0
        %267 = vst.msk [vmem:[#allocation2 + $0x190] sm:$0x3] %vm218, 0.0
        %268 = vst.msk [vmem:[#allocation2 + $0x198] sm:$0xff] %vm215, 0.0
        %269 = vst.msk [vmem:[#allocation2 + $0x1a0] sm:$0xff] %vm215, 0.0
        %270 = vst.msk [vmem:[#allocation2 + $0x1a8] sm:$0x3] %vm218, 0.0
        %s271 = scalar_lea.vmem [#allocation2], 24
        %272 = vst.msk [vmem:[%s271 + $0x1] sm:$0xff] %vm215, %v183
        %273 = vst.msk [vmem:[%s271 + $0x9] sm:$0xff] %vm215, %v184
        %274 = vst.msk [vmem:[%s271 + $0x19] sm:$0xff] %vm215, %v185
        %275 = vst.msk [vmem:[%s271 + $0x21] sm:$0xff] %vm215, %v186
        %276 = vst.msk [vmem:[%s271 + $0x31] sm:$0xff] %vm215, %v187
        %277 = vst.msk [vmem:[%s271 + $0x39] sm:$0xff] %vm215, %v188
        %278 = vst.msk [vmem:[%s271 + $0x49] sm:$0xff] %vm215, %v189
        %279 = vst.msk [vmem:[%s271 + $0x51] sm:$0xff] %vm215, %v190
        %280 = vst.msk [vmem:[%s271 + $0x61] sm:$0xff] %vm215, %v191
        %281 = vst.msk [vmem:[%s271 + $0x69] sm:$0xff] %vm215, %v192
        %282 = vst.msk [vmem:[%s271 + $0x79] sm:$0xff] %vm215, %v193
        %283 = vst.msk [vmem:[%s271 + $0x81] sm:$0xff] %vm215, %v194
        %284 = vst.msk [vmem:[%s271 + $0x91] sm:$0xff] %vm215, %v195
        %285 = vst.msk [vmem:[%s271 + $0x99] sm:$0xff] %vm215, %v196
        %286 = vst.msk [vmem:[%s271 + $0xa9] sm:$0xff] %vm215, %v197
        %287 = vst.msk [vmem:[%s271 + $0xb1] sm:$0xff] %vm215, %v198
        %288 = vst.msk [vmem:[%s271 + $0xc1] sm:$0xff] %vm215, %v199
        %289 = vst.msk [vmem:[%s271 + $0xc9] sm:$0xff] %vm215, %v200
        %290 = vst.msk [vmem:[%s271 + $0xd9] sm:$0xff] %vm215, %v201
        %291 = vst.msk [vmem:[%s271 + $0xe1] sm:$0xff] %vm215, %v202
        %292 = vst.msk [vmem:[%s271 + $0xf1] sm:$0xff] %vm215, %v203
        %293 = vst.msk [vmem:[%s271 + $0xf9] sm:$0xff] %vm215, %v204
        %294 = vst.msk [vmem:[%s271 + $0x109] sm:$0xff] %vm215, %v205
        %295 = vst.msk [vmem:[%s271 + $0x111] sm:$0xff] %vm215, %v206
        %296 = vst.msk [vmem:[%s271 + $0x121] sm:$0xff] %vm215, %v207
        %297 = vst.msk [vmem:[%s271 + $0x129] sm:$0xff] %vm215, %v208
        %298 = vst.msk [vmem:[%s271 + $0x139] sm:$0xff] %vm215, %v209
        %299 = vst.msk [vmem:[%s271 + $0x141] sm:$0xff] %vm215, %v210
        %300 = vst.msk [vmem:[%s271 + $0x151] sm:$0xff] %vm215, %v211
        %301 = vst.msk [vmem:[%s271 + $0x159] sm:$0xff] %vm215, %v212
        %302 = vst.msk [vmem:[%s271 + $0x169] sm:$0xff] %vm215, %v213
        %303 = vst.msk [vmem:[%s271 + $0x171] sm:$0xff] %vm215, %v214
        %v304 = vld [vmem:[#allocation2] sm:$0xff]
        %v305 = vld [vmem:[#allocation2 + $0x8] sm:$0xff]
        %v306 = vld [vmem:[#allocation2 + $0x18] sm:$0xff]
        %v307 = vld [vmem:[#allocation2 + $0x20] sm:$0xff]
        %v308 = vld [vmem:[#allocation2 + $0x30] sm:$0xff]
        %v309 = vld [vmem:[#allocation2 + $0x38] sm:$0xff]
        %v310 = vld [vmem:[#allocation2 + $0x48] sm:$0xff]
        %v311 = vld [vmem:[#allocation2 + $0x50] sm:$0xff]
        %v312 = vld [vmem:[#allocation2 + $0x60] sm:$0xff]
        %v313 = vld [vmem:[#allocation2 + $0x68] sm:$0xff]
        %v314 = vld [vmem:[#allocation2 + $0x78] sm:$0xff]
        %v315 = vld [vmem:[#allocation2 + $0x80] sm:$0xff]
        %v316 = vld [vmem:[#allocation2 + $0x90] sm:$0xff]
        %v317 = vld [vmem:[#allocation2 + $0x98] sm:$0xff]
        %v318 = vld [vmem:[#allocation2 + $0xa8] sm:$0xff]
        %v319 = vld [vmem:[#allocation2 + $0xb0] sm:$0xff]
        %v320 = vld [vmem:[#allocation2 + $0xc0] sm:$0xff]
        %v321 = vld [vmem:[#allocation2 + $0xc8] sm:$0xff]
        %v322 = vld [vmem:[#allocation2 + $0xd8] sm:$0xff]
        %v323 = vld [vmem:[#allocation2 + $0xe0] sm:$0xff]
        %v324 = vld [vmem:[#allocation2 + $0xf0] sm:$0xff]
        %v325 = vld [vmem:[#allocation2 + $0xf8] sm:$0xff]
        %v326 = vld [vmem:[#allocation2 + $0x108] sm:$0xff]
        %v327 = vld [vmem:[#allocation2 + $0x110] sm:$0xff]
        %v328 = vld [vmem:[#allocation2 + $0x120] sm:$0xff]
        %v329 = vld [vmem:[#allocation2 + $0x128] sm:$0xff]
        %v330 = vld [vmem:[#allocation2 + $0x138] sm:$0xff]
        %v331 = vld [vmem:[#allocation2 + $0x140] sm:$0xff]
        %v332 = vld [vmem:[#allocation2 + $0x150] sm:$0xff]
        %v333 = vld [vmem:[#allocation2 + $0x158] sm:$0xff]
        %v334 = vld [vmem:[#allocation2 + $0x168] sm:$0xff]
        %v335 = vld [vmem:[#allocation2 + $0x170] sm:$0xff]
        %v336 = vpack.c.bf16 %v304, %v304
        %v337 = vpack.c.bf16 %v305, %v305
        %v338 = vpack.c.bf16 %v306, %v306
        %v339 = vpack.c.bf16 %v307, %v307
        %v340 = vpack.c.bf16 %v308, %v308
        %v341 = vpack.c.bf16 %v309, %v309
        %v342 = vpack.c.bf16 %v310, %v310
        %v343 = vpack.c.bf16 %v311, %v311
        %v344 = vpack.c.bf16 %v312, %v312
        %v345 = vpack.c.bf16 %v313, %v313
        %v346 = vpack.c.bf16 %v314, %v314
        %v347 = vpack.c.bf16 %v315, %v315
        %v348 = vpack.c.bf16 %v316, %v316
        %v349 = vpack.c.bf16 %v317, %v317
        %v350 = vpack.c.bf16 %v318, %v318
        %v351 = vpack.c.bf16 %v319, %v319
        %v352 = vpack.c.bf16 %v320, %v320
        %v353 = vpack.c.bf16 %v321, %v321
        %v354 = vpack.c.bf16 %v322, %v322
        %v355 = vpack.c.bf16 %v323, %v323
        %v356 = vpack.c.bf16 %v324, %v324
        %v357 = vpack.c.bf16 %v325, %v325
        %v358 = vpack.c.bf16 %v326, %v326
        %v359 = vpack.c.bf16 %v327, %v327
        %v360 = vpack.c.bf16 %v328, %v328
        %v361 = vpack.c.bf16 %v329, %v329
        %v362 = vpack.c.bf16 %v330, %v330
        %v363 = vpack.c.bf16 %v331, %v331
        %v364 = vpack.c.bf16 %v332, %v332
        %v365 = vpack.c.bf16 %v333, %v333
        %v366 = vpack.c.bf16 %v334, %v334
        %v367 = vpack.c.bf16 %v335, %v335
        %vm368 = vcmask 27648
        %369 = vst.msk [vmem:[#allocation3] sm:$0xf] %vm368, %v336
        %370 = vst.msk [vmem:[#allocation3 + $0x4] sm:$0xf] %vm368, %v337
        %371 = vst.msk [vmem:[#allocation3 + $0x8] sm:$0xf] %vm368, %v338
        %372 = vst.msk [vmem:[#allocation3 + $0xc] sm:$0xf] %vm368, %v339
        %373 = vst.msk [vmem:[#allocation3 + $0x10] sm:$0xf] %vm368, %v340
        %374 = vst.msk [vmem:[#allocation3 + $0x14] sm:$0xf] %vm368, %v341
        %375 = vst.msk [vmem:[#allocation3 + $0x18] sm:$0xf] %vm368, %v342
        %376 = vst.msk [vmem:[#allocation3 + $0x1c] sm:$0xf] %vm368, %v343
        %377 = vst.msk [vmem:[#allocation3 + $0x20] sm:$0xf] %vm368, %v344
        %378 = vst.msk [vmem:[#allocation3 + $0x24] sm:$0xf] %vm368, %v345
        %379 = vst.msk [vmem:[#allocation3 + $0x28] sm:$0xf] %vm368, %v346
        %380 = vst.msk [vmem:[#allocation3 + $0x2c] sm:$0xf] %vm368, %v347
        %381 = vst.msk [vmem:[#allocation3 + $0x30] sm:$0xf] %vm368, %v348
        %382 = vst.msk [vmem:[#allocation3 + $0x34] sm:$0xf] %vm368, %v349
        %383 = vst.msk [vmem:[#allocation3 + $0x38] sm:$0xf] %vm368, %v350
        %384 = vst.msk [vmem:[#allocation3 + $0x3c] sm:$0xf] %vm368, %v351
        %385 = vst.msk [vmem:[#allocation3 + $0x40] sm:$0xf] %vm368, %v352
        %386 = vst.msk [vmem:[#allocation3 + $0x44] sm:$0xf] %vm368, %v353
        %387 = vst.msk [vmem:[#allocation3 + $0x48] sm:$0xf] %vm368, %v354
        %388 = vst.msk [vmem:[#allocation3 + $0x4c] sm:$0xf] %vm368, %v355
        %389 = vst.msk [vmem:[#allocation3 + $0x50] sm:$0xf] %vm368, %v356
        %390 = vst.msk [vmem:[#allocation3 + $0x54] sm:$0xf] %vm368, %v357
        %391 = vst.msk [vmem:[#allocation3 + $0x58] sm:$0xf] %vm368, %v358
        %392 = vst.msk [vmem:[#allocation3 + $0x5c] sm:$0xf] %vm368, %v359
        %393 = vst.msk [vmem:[#allocation3 + $0x60] sm:$0xf] %vm368, %v360
        %394 = vst.msk [vmem:[#allocation3 + $0x64] sm:$0xf] %vm368, %v361
        %395 = vst.msk [vmem:[#allocation3 + $0x68] sm:$0xf] %vm368, %v362
        %396 = vst.msk [vmem:[#allocation3 + $0x6c] sm:$0xf] %vm368, %v363
        %397 = vst.msk [vmem:[#allocation3 + $0x70] sm:$0xf] %vm368, %v364
        %398 = vst.msk [vmem:[#allocation3 + $0x74] sm:$0xf] %vm368, %v365
        %399 = vst.msk [vmem:[#allocation3 + $0x78] sm:$0xf] %vm368, %v366
        %400 = vst.msk [vmem:[#allocation3 + $0x7c] sm:$0xf] %vm368, %v367
        %v401 = vld [vmem:[#allocation2 + $0x1] sm:$0xff]
        %v402 = vld [vmem:[#allocation2 + $0x9] sm:$0xff]
        %v403 = vld [vmem:[#allocation2 + $0x19] sm:$0xff]
        %v404 = vld [vmem:[#allocation2 + $0x21] sm:$0xff]
        %v405 = vld [vmem:[#allocation2 + $0x31] sm:$0xff]
        %v406 = vld [vmem:[#allocation2 + $0x39] sm:$0xff]
        %v407 = vld [vmem:[#allocation2 + $0x49] sm:$0xff]
        %v408 = vld [vmem:[#allocation2 + $0x51] sm:$0xff]
        %v409 = vld [vmem:[#allocation2 + $0x61] sm:$0xff]
        %v410 = vld [vmem:[#allocation2 + $0x69] sm:$0xff]
        %v411 = vld [vmem:[#allocation2 + $0x79] sm:$0xff]
        %v412 = vld [vmem:[#allocation2 + $0x81] sm:$0xff]
        %v413 = vld [vmem:[#allocation2 + $0x91] sm:$0xff]
        %v414 = vld [vmem:[#allocation2 + $0x99] sm:$0xff]
        %v415 = vld [vmem:[#allocation2 + $0xa9] sm:$0xff]
        %v416 = vld [vmem:[#allocation2 + $0xb1] sm:$0xff]
        %v417 = vld [vmem:[#allocation2 + $0xc1] sm:$0xff]
        %v418 = vld [vmem:[#allocation2 + $0xc9] sm:$0xff]
        %v419 = vld [vmem:[#allocation2 + $0xd9] sm:$0xff]
        %v420 = vld [vmem:[#allocation2 + $0xe1] sm:$0xff]
        %v421 = vld [vmem:[#allocation2 + $0xf1] sm:$0xff]
        %v422 = vld [vmem:[#allocation2 + $0xf9] sm:$0xff]
        %v423 = vld [vmem:[#allocation2 + $0x109] sm:$0xff]
        %v424 = vld [vmem:[#allocation2 + $0x111] sm:$0xff]
        %v425 = vld [vmem:[#allocation2 + $0x121] sm:$0xff]
        %v426 = vld [vmem:[#allocation2 + $0x129] sm:$0xff]
        %v427 = vld [vmem:[#allocation2 + $0x139] sm:$0xff]
        %v428 = vld [vmem:[#allocation2 + $0x141] sm:$0xff]
        %v429 = vld [vmem:[#allocation2 + $0x151] sm:$0xff]
        %v430 = vld [vmem:[#allocation2 + $0x159] sm:$0xff]
        %v431 = vld [vmem:[#allocation2 + $0x169] sm:$0xff]
        %v432 = vld [vmem:[#allocation2 + $0x171] sm:$0xff]
        %v433 = vpack.c.bf16 %v401, %v401
        %v434 = vpack.c.bf16 %v402, %v402
        %v435 = vpack.c.bf16 %v403, %v403
        %v436 = vpack.c.bf16 %v404, %v404
        %v437 = vpack.c.bf16 %v405, %v405
        %v438 = vpack.c.bf16 %v406, %v406
        %v439 = vpack.c.bf16 %v407, %v407
        %v440 = vpack.c.bf16 %v408, %v408
        %v441 = vpack.c.bf16 %v409, %v409
        %v442 = vpack.c.bf16 %v410, %v410
        %v443 = vpack.c.bf16 %v411, %v411
        %v444 = vpack.c.bf16 %v412, %v412
        %v445 = vpack.c.bf16 %v413, %v413
        %v446 = vpack.c.bf16 %v414, %v414
        %v447 = vpack.c.bf16 %v415, %v415
        %v448 = vpack.c.bf16 %v416, %v416
        %v449 = vpack.c.bf16 %v417, %v417
        %v450 = vpack.c.bf16 %v418, %v418
        %v451 = vpack.c.bf16 %v419, %v419
        %v452 = vpack.c.bf16 %v420, %v420
        %v453 = vpack.c.bf16 %v421, %v421
        %v454 = vpack.c.bf16 %v422, %v422
        %v455 = vpack.c.bf16 %v423, %v423
        %v456 = vpack.c.bf16 %v424, %v424
        %v457 = vpack.c.bf16 %v425, %v425
        %v458 = vpack.c.bf16 %v426, %v426
        %v459 = vpack.c.bf16 %v427, %v427
        %v460 = vpack.c.bf16 %v428, %v428
        %v461 = vpack.c.bf16 %v429, %v429
        %v462 = vpack.c.bf16 %v430, %v430
        %v463 = vpack.c.bf16 %v431, %v431
        %v464 = vpack.c.bf16 %v432, %v432
        %497 = vrot.lane.b32.xlu0 %v433, 4
        %v498 = vpop.permute.xlu0 %497
        %499 = vrot.lane.b32.xlu0 %v434, 4
        %v500 = vpop.permute.xlu0 %499
        %501 = vrot.lane.b32.xlu0 %v435, 4
        %v502 = vpop.permute.xlu0 %501
        %503 = vrot.lane.b32.xlu0 %v436, 4
        %v504 = vpop.permute.xlu0 %503
        %505 = vrot.lane.b32.xlu0 %v437, 4
        %v506 = vpop.permute.xlu0 %505
        %507 = vrot.lane.b32.xlu0 %v438, 4
        %v508 = vpop.permute.xlu0 %507
        %509 = vrot.lane.b32.xlu0 %v439, 4
        %v510 = vpop.permute.xlu0 %509
        %511 = vrot.lane.b32.xlu0 %v440, 4
        %v512 = vpop.permute.xlu0 %511
        %513 = vrot.lane.b32.xlu0 %v441, 4
        %v514 = vpop.permute.xlu0 %513
        %515 = vrot.lane.b32.xlu0 %v442, 4
        %v516 = vpop.permute.xlu0 %515
        %517 = vrot.lane.b32.xlu0 %v443, 4
        %v518 = vpop.permute.xlu0 %517
        %519 = vrot.lane.b32.xlu0 %v444, 4
        %v520 = vpop.permute.xlu0 %519
        %521 = vrot.lane.b32.xlu0 %v445, 4
        %v522 = vpop.permute.xlu0 %521
        %523 = vrot.lane.b32.xlu0 %v446, 4
        %v524 = vpop.permute.xlu0 %523
        %525 = vrot.lane.b32.xlu0 %v447, 4
        %v526 = vpop.permute.xlu0 %525
        %527 = vrot.lane.b32.xlu0 %v448, 4
        %v528 = vpop.permute.xlu0 %527
        %529 = vrot.lane.b32.xlu0 %v449, 4
        %v530 = vpop.permute.xlu0 %529
        %531 = vrot.lane.b32.xlu0 %v450, 4
        %v532 = vpop.permute.xlu0 %531
        %533 = vrot.lane.b32.xlu0 %v451, 4
        %v534 = vpop.permute.xlu0 %533
        %535 = vrot.lane.b32.xlu0 %v452, 4
        %v536 = vpop.permute.xlu0 %535
        %537 = vrot.lane.b32.xlu0 %v453, 4
        %v538 = vpop.permute.xlu0 %537
        %539 = vrot.lane.b32.xlu0 %v454, 4
        %v540 = vpop.permute.xlu0 %539
        %541 = vrot.lane.b32.xlu0 %v455, 4
        %v542 = vpop.permute.xlu0 %541
        %543 = vrot.lane.b32.xlu0 %v456, 4
        %v544 = vpop.permute.xlu0 %543
        %545 = vrot.lane.b32.xlu0 %v457, 4
        %v546 = vpop.permute.xlu0 %545
        %547 = vrot.lane.b32.xlu0 %v458, 4
        %v548 = vpop.permute.xlu0 %547
        %549 = vrot.lane.b32.xlu0 %v459, 4
        %v550 = vpop.permute.xlu0 %549
        %551 = vrot.lane.b32.xlu0 %v460, 4
        %v552 = vpop.permute.xlu0 %551
        %553 = vrot.lane.b32.xlu0 %v461, 4
        %v554 = vpop.permute.xlu0 %553
        %555 = vrot.lane.b32.xlu0 %v462, 4
        %v556 = vpop.permute.xlu0 %555
        %557 = vrot.lane.b32.xlu0 %v463, 4
        %v558 = vpop.permute.xlu0 %557
        %559 = vrot.lane.b32.xlu0 %v464, 4
        %v560 = vpop.permute.xlu0 %559
        %vm593 = vcmask 60448
        %594 = vst.msk [vmem:[#allocation3] sm:$0xf] %vm593, %v498
        %595 = vst.msk [vmem:[#allocation3 + $0x4] sm:$0xf] %vm593, %v500
        %596 = vst.msk [vmem:[#allocation3 + $0x8] sm:$0xf] %vm593, %v502
        %597 = vst.msk [vmem:[#allocation3 + $0xc] sm:$0xf] %vm593, %v504
        %598 = vst.msk [vmem:[#allocation3 + $0x10] sm:$0xf] %vm593, %v506
        %599 = vst.msk [vmem:[#allocation3 + $0x14] sm:$0xf] %vm593, %v508
        %600 = vst.msk [vmem:[#allocation3 + $0x18] sm:$0xf] %vm593, %v510
        %601 = vst.msk [vmem:[#allocation3 + $0x1c] sm:$0xf] %vm593, %v512
        %602 = vst.msk [vmem:[#allocation3 + $0x20] sm:$0xf] %vm593, %v514
        %603 = vst.msk [vmem:[#allocation3 + $0x24] sm:$0xf] %vm593, %v516
        %604 = vst.msk [vmem:[#allocation3 + $0x28] sm:$0xf] %vm593, %v518
        %605 = vst.msk [vmem:[#allocation3 + $0x2c] sm:$0xf] %vm593, %v520
        %606 = vst.msk [vmem:[#allocation3 + $0x30] sm:$0xf] %vm593, %v522
        %607 = vst.msk [vmem:[#allocation3 + $0x34] sm:$0xf] %vm593, %v524
        %608 = vst.msk [vmem:[#allocation3 + $0x38] sm:$0xf] %vm593, %v526
        %609 = vst.msk [vmem:[#allocation3 + $0x3c] sm:$0xf] %vm593, %v528
        %610 = vst.msk [vmem:[#allocation3 + $0x40] sm:$0xf] %vm593, %v530
        %611 = vst.msk [vmem:[#allocation3 + $0x44] sm:$0xf] %vm593, %v532
        %612 = vst.msk [vmem:[#allocation3 + $0x48] sm:$0xf] %vm593, %v534
        %613 = vst.msk [vmem:[#allocation3 + $0x4c] sm:$0xf] %vm593, %v536
        %614 = vst.msk [vmem:[#allocation3 + $0x50] sm:$0xf] %vm593, %v538
        %615 = vst.msk [vmem:[#allocation3 + $0x54] sm:$0xf] %vm593, %v540
        %616 = vst.msk [vmem:[#allocation3 + $0x58] sm:$0xf] %vm593, %v542
        %617 = vst.msk [vmem:[#allocation3 + $0x5c] sm:$0xf] %vm593, %v544
        %618 = vst.msk [vmem:[#allocation3 + $0x60] sm:$0xf] %vm593, %v546
        %619 = vst.msk [vmem:[#allocation3 + $0x64] sm:$0xf] %vm593, %v548
        %620 = vst.msk [vmem:[#allocation3 + $0x68] sm:$0xf] %vm593, %v550
        %621 = vst.msk [vmem:[#allocation3 + $0x6c] sm:$0xf] %vm593, %v552
        %622 = vst.msk [vmem:[#allocation3 + $0x70] sm:$0xf] %vm593, %v554
        %623 = vst.msk [vmem:[#allocation3 + $0x74] sm:$0xf] %vm593, %v556
        %624 = vst.msk [vmem:[#allocation3 + $0x78] sm:$0xf] %vm593, %v558
        %625 = vst.msk [vmem:[#allocation3 + $0x7c] sm:$0xf] %vm593, %v560
        %v626 = vld [vmem:[#allocation2 + $0x2] sm:$0xff]
        %v627 = vld [vmem:[#allocation2 + $0xa] sm:$0xff]
        %v628 = vld [vmem:[#allocation2 + $0x1a] sm:$0xff]
        %v629 = vld [vmem:[#allocation2 + $0x22] sm:$0xff]
        %v630 = vld [vmem:[#allocation2 + $0x32] sm:$0xff]
        %v631 = vld [vmem:[#allocation2 + $0x3a] sm:$0xff]
        %v632 = vld [vmem:[#allocation2 + $0x4a] sm:$0xff]
        %v633 = vld [vmem:[#allocation2 + $0x52] sm:$0xff]
        %v634 = vld [vmem:[#allocation2 + $0x62] sm:$0xff]
        %v635 = vld [vmem:[#allocation2 + $0x6a] sm:$0xff]
        %v636 = vld [vmem:[#allocation2 + $0x7a] sm:$0xff]
        %v637 = vld [vmem:[#allocation2 + $0x82] sm:$0xff]
        %v638 = vld [vmem:[#allocation2 + $0x92] sm:$0xff]
        %v639 = vld [vmem:[#allocation2 + $0x9a] sm:$0xff]
        %v640 = vld [vmem:[#allocation2 + $0xaa] sm:$0xff]
        %v641 = vld [vmem:[#allocation2 + $0xb2] sm:$0xff]
        %v642 = vld [vmem:[#allocation2 + $0xc2] sm:$0xff]
        %v643 = vld [vmem:[#allocation2 + $0xca] sm:$0xff]
        %v644 = vld [vmem:[#allocation2 + $0xda] sm:$0xff]
        %v645 = vld [vmem:[#allocation2 + $0xe2] sm:$0xff]
        %v646 = vld [vmem:[#allocation2 + $0xf2] sm:$0xff]
        %v647 = vld [vmem:[#allocation2 + $0xfa] sm:$0xff]
        %v648 = vld [vmem:[#allocation2 + $0x10a] sm:$0xff]
        %v649 = vld [vmem:[#allocation2 + $0x112] sm:$0xff]
        %v650 = vld [vmem:[#allocation2 + $0x122] sm:$0xff]
        %v651 = vld [vmem:[#allocation2 + $0x12a] sm:$0xff]
        %v652 = vld [vmem:[#allocation2 + $0x13a] sm:$0xff]
        %v653 = vld [vmem:[#allocation2 + $0x142] sm:$0xff]
        %v654 = vld [vmem:[#allocation2 + $0x152] sm:$0xff]
        %v655 = vld [vmem:[#allocation2 + $0x15a] sm:$0xff]
        %v656 = vld [vmem:[#allocation2 + $0x16a] sm:$0xff]
        %v657 = vld [vmem:[#allocation2 + $0x172] sm:$0xff]
        %v658 = vpack.c.bf16 %v626, %v626
        %v659 = vpack.c.bf16 %v627, %v627
        %v660 = vpack.c.bf16 %v628, %v628
        %v661 = vpack.c.bf16 %v629, %v629
        %v662 = vpack.c.bf16 %v630, %v630
        %v663 = vpack.c.bf16 %v631, %v631
        %v664 = vpack.c.bf16 %v632, %v632
        %v665 = vpack.c.bf16 %v633, %v633
        %v666 = vpack.c.bf16 %v634, %v634
        %v667 = vpack.c.bf16 %v635, %v635
        %v668 = vpack.c.bf16 %v636, %v636
        %v669 = vpack.c.bf16 %v637, %v637
        %v670 = vpack.c.bf16 %v638, %v638
        %v671 = vpack.c.bf16 %v639, %v639
        %v672 = vpack.c.bf16 %v640, %v640
        %v673 = vpack.c.bf16 %v641, %v641
        %v674 = vpack.c.bf16 %v642, %v642
        %v675 = vpack.c.bf16 %v643, %v643
        %v676 = vpack.c.bf16 %v644, %v644
        %v677 = vpack.c.bf16 %v645, %v645
        %v678 = vpack.c.bf16 %v646, %v646
        %v679 = vpack.c.bf16 %v647, %v647
        %v680 = vpack.c.bf16 %v648, %v648
        %v681 = vpack.c.bf16 %v649, %v649
        %v682 = vpack.c.bf16 %v650, %v650
        %v683 = vpack.c.bf16 %v651, %v651
        %v684 = vpack.c.bf16 %v652, %v652
        %v685 = vpack.c.bf16 %v653, %v653
        %v686 = vpack.c.bf16 %v654, %v654
        %v687 = vpack.c.bf16 %v655, %v655
        %v688 = vpack.c.bf16 %v656, %v656
        %v689 = vpack.c.bf16 %v657, %v657
        %722 = vrot.lane.b32.xlu0 %v658, 8
        %v723 = vpop.permute.xlu0 %722
        %724 = vrot.lane.b32.xlu0 %v659, 8
        %v725 = vpop.permute.xlu0 %724
        %726 = vrot.lane.b32.xlu0 %v660, 8
        %v727 = vpop.permute.xlu0 %726
        %728 = vrot.lane.b32.xlu0 %v661, 8
        %v729 = vpop.permute.xlu0 %728
        %730 = vrot.lane.b32.xlu0 %v662, 8
        %v731 = vpop.permute.xlu0 %730
        %732 = vrot.lane.b32.xlu0 %v663, 8
        %v733 = vpop.permute.xlu0 %732
        %734 = vrot.lane.b32.xlu0 %v664, 8
        %v735 = vpop.permute.xlu0 %734
        %736 = vrot.lane.b32.xlu0 %v665, 8
        %v737 = vpop.permute.xlu0 %736
        %738 = vrot.lane.b32.xlu0 %v666, 8
        %v739 = vpop.permute.xlu0 %738
        %740 = vrot.lane.b32.xlu0 %v667, 8
        %v741 = vpop.permute.xlu0 %740
        %742 = vrot.lane.b32.xlu0 %v668, 8
        %v743 = vpop.permute.xlu0 %742
        %744 = vrot.lane.b32.xlu0 %v669, 8
        %v745 = vpop.permute.xlu0 %744
        %746 = vrot.lane.b32.xlu0 %v670, 8
        %v747 = vpop.permute.xlu0 %746
        %748 = vrot.lane.b32.xlu0 %v671, 8
        %v749 = vpop.permute.xlu0 %748
        %750 = vrot.lane.b32.xlu0 %v672, 8
        %v751 = vpop.permute.xlu0 %750
        %752 = vrot.lane.b32.xlu0 %v673, 8
        %v753 = vpop.permute.xlu0 %752
        %754 = vrot.lane.b32.xlu0 %v674, 8
        %v755 = vpop.permute.xlu0 %754
        %756 = vrot.lane.b32.xlu0 %v675, 8
        %v757 = vpop.permute.xlu0 %756
        %758 = vrot.lane.b32.xlu0 %v676, 8
        %v759 = vpop.permute.xlu0 %758
        %760 = vrot.lane.b32.xlu0 %v677, 8
        %v761 = vpop.permute.xlu0 %760
        %762 = vrot.lane.b32.xlu0 %v678, 8
        %v763 = vpop.permute.xlu0 %762
        %764 = vrot.lane.b32.xlu0 %v679, 8
        %v765 = vpop.permute.xlu0 %764
        %766 = vrot.lane.b32.xlu0 %v680, 8
        %v767 = vpop.permute.xlu0 %766
        %768 = vrot.lane.b32.xlu0 %v681, 8
        %v769 = vpop.permute.xlu0 %768
        %770 = vrot.lane.b32.xlu0 %v682, 8
        %v771 = vpop.permute.xlu0 %770
        %772 = vrot.lane.b32.xlu0 %v683, 8
        %v773 = vpop.permute.xlu0 %772
        %774 = vrot.lane.b32.xlu0 %v684, 8
        %v775 = vpop.permute.xlu0 %774
        %776 = vrot.lane.b32.xlu0 %v685, 8
        %v777 = vpop.permute.xlu0 %776
        %778 = vrot.lane.b32.xlu0 %v686, 8
        %v779 = vpop.permute.xlu0 %778
        %780 = vrot.lane.b32.xlu0 %v687, 8
        %v781 = vpop.permute.xlu0 %780
        %782 = vrot.lane.b32.xlu0 %v688, 8
        %v783 = vpop.permute.xlu0 %782
        %784 = vrot.lane.b32.xlu0 %v689, 8
        %v785 = vpop.permute.xlu0 %784
        %vm818 = vcmask 93248
        %819 = vst.msk [vmem:[#allocation3] sm:$0xf] %vm818, %v723
        %820 = vst.msk [vmem:[#allocation3 + $0x4] sm:$0xf] %vm818, %v725
        %821 = vst.msk [vmem:[#allocation3 + $0x8] sm:$0xf] %vm818, %v727
        %822 = vst.msk [vmem:[#allocation3 + $0xc] sm:$0xf] %vm818, %v729
        %823 = vst.msk [vmem:[#allocation3 + $0x10] sm:$0xf] %vm818, %v731
        %824 = vst.msk [vmem:[#allocation3 + $0x14] sm:$0xf] %vm818, %v733
        %825 = vst.msk [vmem:[#allocation3 + $0x18] sm:$0xf] %vm818, %v735
        %826 = vst.msk [vmem:[#allocation3 + $0x1c] sm:$0xf] %vm818, %v737
        %827 = vst.msk [vmem:[#allocation3 + $0x20] sm:$0xf] %vm818, %v739
        %828 = vst.msk [vmem:[#allocation3 + $0x24] sm:$0xf] %vm818, %v741
        %829 = vst.msk [vmem:[#allocation3 + $0x28] sm:$0xf] %vm818, %v743
        %830 = vst.msk [vmem:[#allocation3 + $0x2c] sm:$0xf] %vm818, %v745
        %831 = vst.msk [vmem:[#allocation3 + $0x30] sm:$0xf] %vm818, %v747
        %832 = vst.msk [vmem:[#allocation3 + $0x34] sm:$0xf] %vm818, %v749
        %833 = vst.msk [vmem:[#allocation3 + $0x38] sm:$0xf] %vm818, %v751
        %834 = vst.msk [vmem:[#allocation3 + $0x3c] sm:$0xf] %vm818, %v753
        %835 = vst.msk [vmem:[#allocation3 + $0x40] sm:$0xf] %vm818, %v755
        %836 = vst.msk [vmem:[#allocation3 + $0x44] sm:$0xf] %vm818, %v757
        %837 = vst.msk [vmem:[#allocation3 + $0x48] sm:$0xf] %vm818, %v759
        %838 = vst.msk [vmem:[#allocation3 + $0x4c] sm:$0xf] %vm818, %v761
        %839 = vst.msk [vmem:[#allocation3 + $0x50] sm:$0xf] %vm818, %v763
        %840 = vst.msk [vmem:[#allocation3 + $0x54] sm:$0xf] %vm818, %v765
        %841 = vst.msk [vmem:[#allocation3 + $0x58] sm:$0xf] %vm818, %v767
        %842 = vst.msk [vmem:[#allocation3 + $0x5c] sm:$0xf] %vm818, %v769
        %843 = vst.msk [vmem:[#allocation3 + $0x60] sm:$0xf] %vm818, %v771
        %844 = vst.msk [vmem:[#allocation3 + $0x64] sm:$0xf] %vm818, %v773
        %845 = vst.msk [vmem:[#allocation3 + $0x68] sm:$0xf] %vm818, %v775
        %846 = vst.msk [vmem:[#allocation3 + $0x6c] sm:$0xf] %vm818, %v777
        %847 = vst.msk [vmem:[#allocation3 + $0x70] sm:$0xf] %vm818, %v779
        %848 = vst.msk [vmem:[#allocation3 + $0x74] sm:$0xf] %vm818, %v781
        %849 = vst.msk [vmem:[#allocation3 + $0x78] sm:$0xf] %vm818, %v783
        %850 = vst.msk [vmem:[#allocation3 + $0x7c] sm:$0xf] %vm818, %v785
        %v851 = vld [vmem:[%s271] sm:$0xff]
        %v852 = vld [vmem:[%s271 + $0x8] sm:$0xff]
        %v853 = vld [vmem:[%s271 + $0x18] sm:$0xff]
        %v854 = vld [vmem:[%s271 + $0x20] sm:$0xff]
        %v855 = vld [vmem:[%s271 + $0x30] sm:$0xff]
        %v856 = vld [vmem:[%s271 + $0x38] sm:$0xff]
        %v857 = vld [vmem:[%s271 + $0x48] sm:$0xff]
        %v858 = vld [vmem:[%s271 + $0x50] sm:$0xff]
        %v859 = vld [vmem:[%s271 + $0x60] sm:$0xff]
        %v860 = vld [vmem:[%s271 + $0x68] sm:$0xff]
        %v861 = vld [vmem:[%s271 + $0x78] sm:$0xff]
        %v862 = vld [vmem:[%s271 + $0x80] sm:$0xff]
        %v863 = vld [vmem:[%s271 + $0x90] sm:$0xff]
        %v864 = vld [vmem:[%s271 + $0x98] sm:$0xff]
        %v865 = vld [vmem:[%s271 + $0xa8] sm:$0xff]
        %v866 = vld [vmem:[%s271 + $0xb0] sm:$0xff]
        %v867 = vld [vmem:[%s271 + $0xc0] sm:$0xff]
        %v868 = vld [vmem:[%s271 + $0xc8] sm:$0xff]
        %v869 = vld [vmem:[%s271 + $0xd8] sm:$0xff]
        %v870 = vld [vmem:[%s271 + $0xe0] sm:$0xff]
        %v871 = vld [vmem:[%s271 + $0xf0] sm:$0xff]
        %v872 = vld [vmem:[%s271 + $0xf8] sm:$0xff]
        %v873 = vld [vmem:[%s271 + $0x108] sm:$0xff]
        %v874 = vld [vmem:[%s271 + $0x110] sm:$0xff]
        %v875 = vld [vmem:[%s271 + $0x120] sm:$0xff]
        %v876 = vld [vmem:[%s271 + $0x128] sm:$0xff]
        %v877 = vld [vmem:[%s271 + $0x138] sm:$0xff]
        %v878 = vld [vmem:[%s271 + $0x140] sm:$0xff]
        %v879 = vld [vmem:[%s271 + $0x150] sm:$0xff]
        %v880 = vld [vmem:[%s271 + $0x158] sm:$0xff]
        %v881 = vld [vmem:[%s271 + $0x168] sm:$0xff]
        %v882 = vld [vmem:[%s271 + $0x170] sm:$0xff]
        %v883 = vpack.c.bf16 %v851, %v851
        %v884 = vpack.c.bf16 %v852, %v852
        %v885 = vpack.c.bf16 %v853, %v853
        %v886 = vpack.c.bf16 %v854, %v854
        %v887 = vpack.c.bf16 %v855, %v855
        %v888 = vpack.c.bf16 %v856, %v856
        %v889 = vpack.c.bf16 %v857, %v857
        %v890 = vpack.c.bf16 %v858, %v858
        %v891 = vpack.c.bf16 %v859, %v859
        %v892 = vpack.c.bf16 %v860, %v860
        %v893 = vpack.c.bf16 %v861, %v861
        %v894 = vpack.c.bf16 %v862, %v862
        %v895 = vpack.c.bf16 %v863, %v863
        %v896 = vpack.c.bf16 %v864, %v864
        %v897 = vpack.c.bf16 %v865, %v865
        %v898 = vpack.c.bf16 %v866, %v866
        %v899 = vpack.c.bf16 %v867, %v867
        %v900 = vpack.c.bf16 %v868, %v868
        %v901 = vpack.c.bf16 %v869, %v869
        %v902 = vpack.c.bf16 %v870, %v870
        %v903 = vpack.c.bf16 %v871, %v871
        %v904 = vpack.c.bf16 %v872, %v872
        %v905 = vpack.c.bf16 %v873, %v873
        %v906 = vpack.c.bf16 %v874, %v874
        %v907 = vpack.c.bf16 %v875, %v875
        %v908 = vpack.c.bf16 %v876, %v876
        %v909 = vpack.c.bf16 %v877, %v877
        %v910 = vpack.c.bf16 %v878, %v878
        %v911 = vpack.c.bf16 %v879, %v879
        %v912 = vpack.c.bf16 %v880, %v880
        %v913 = vpack.c.bf16 %v881, %v881
        %v914 = vpack.c.bf16 %v882, %v882
        %947 = vrot.lane.b32.xlu0 %v883, 12
        %v948 = vpop.permute.xlu0 %947
        %949 = vrot.lane.b32.xlu0 %v884, 12
        %v950 = vpop.permute.xlu0 %949
        %951 = vrot.lane.b32.xlu0 %v885, 12
        %v952 = vpop.permute.xlu0 %951
        %953 = vrot.lane.b32.xlu0 %v886, 12
        %v954 = vpop.permute.xlu0 %953
        %955 = vrot.lane.b32.xlu0 %v887, 12
        %v956 = vpop.permute.xlu0 %955
        %957 = vrot.lane.b32.xlu0 %v888, 12
        %v958 = vpop.permute.xlu0 %957
        %959 = vrot.lane.b32.xlu0 %v889, 12
        %v960 = vpop.permute.xlu0 %959
        %961 = vrot.lane.b32.xlu0 %v890, 12
        %v962 = vpop.permute.xlu0 %961
        %963 = vrot.lane.b32.xlu0 %v891, 12
        %v964 = vpop.permute.xlu0 %963
        %965 = vrot.lane.b32.xlu0 %v892, 12
        %v966 = vpop.permute.xlu0 %965
        %967 = vrot.lane.b32.xlu0 %v893, 12
        %v968 = vpop.permute.xlu0 %967
        %969 = vrot.lane.b32.xlu0 %v894, 12
        %v970 = vpop.permute.xlu0 %969
        %971 = vrot.lane.b32.xlu0 %v895, 12
        %v972 = vpop.permute.xlu0 %971
        %973 = vrot.lane.b32.xlu0 %v896, 12
        %v974 = vpop.permute.xlu0 %973
        %975 = vrot.lane.b32.xlu0 %v897, 12
        %v976 = vpop.permute.xlu0 %975
        %977 = vrot.lane.b32.xlu0 %v898, 12
        %v978 = vpop.permute.xlu0 %977
        %979 = vrot.lane.b32.xlu0 %v899, 12
        %v980 = vpop.permute.xlu0 %979
        %981 = vrot.lane.b32.xlu0 %v900, 12
        %v982 = vpop.permute.xlu0 %981
        %983 = vrot.lane.b32.xlu0 %v901, 12
        %v984 = vpop.permute.xlu0 %983
        %985 = vrot.lane.b32.xlu0 %v902, 12
        %v986 = vpop.permute.xlu0 %985
        %987 = vrot.lane.b32.xlu0 %v903, 12
        %v988 = vpop.permute.xlu0 %987
        %989 = vrot.lane.b32.xlu0 %v904, 12
        %v990 = vpop.permute.xlu0 %989
        %991 = vrot.lane.b32.xlu0 %v905, 12
        %v992 = vpop.permute.xlu0 %991
        %993 = vrot.lane.b32.xlu0 %v906, 12
        %v994 = vpop.permute.xlu0 %993
        %995 = vrot.lane.b32.xlu0 %v907, 12
        %v996 = vpop.permute.xlu0 %995
        %997 = vrot.lane.b32.xlu0 %v908, 12
        %v998 = vpop.permute.xlu0 %997
        %999 = vrot.lane.b32.xlu0 %v909, 12
        %v1000 = vpop.permute.xlu0 %999
        %1001 = vrot.lane.b32.xlu0 %v910, 12
        %v1002 = vpop.permute.xlu0 %1001
        %1003 = vrot.lane.b32.xlu0 %v911, 12
        %v1004 = vpop.permute.xlu0 %1003
        %1005 = vrot.lane.b32.xlu0 %v912, 12
        %v1006 = vpop.permute.xlu0 %1005
        %1007 = vrot.lane.b32.xlu0 %v913, 12
        %v1008 = vpop.permute.xlu0 %1007
        %1009 = vrot.lane.b32.xlu0 %v914, 12
        %v1010 = vpop.permute.xlu0 %1009
        %vm1043 = vcmask 126048
        %1044 = vst.msk [vmem:[#allocation3] sm:$0xf] %vm1043, %v948
        %1045 = vst.msk [vmem:[#allocation3 + $0x4] sm:$0xf] %vm1043, %v950
        %1046 = vst.msk [vmem:[#allocation3 + $0x8] sm:$0xf] %vm1043, %v952
        %1047 = vst.msk [vmem:[#allocation3 + $0xc] sm:$0xf] %vm1043, %v954
        %1048 = vst.msk [vmem:[#allocation3 + $0x10] sm:$0xf] %vm1043, %v956
        %1049 = vst.msk [vmem:[#allocation3 + $0x14] sm:$0xf] %vm1043, %v958
        %1050 = vst.msk [vmem:[#allocation3 + $0x18] sm:$0xf] %vm1043, %v960
        %1051 = vst.msk [vmem:[#allocation3 + $0x1c] sm:$0xf] %vm1043, %v962
        %1052 = vst.msk [vmem:[#allocation3 + $0x20] sm:$0xf] %vm1043, %v964
        %1053 = vst.msk [vmem:[#allocation3 + $0x24] sm:$0xf] %vm1043, %v966
        %1054 = vst.msk [vmem:[#allocation3 + $0x28] sm:$0xf] %vm1043, %v968
        %1055 = vst.msk [vmem:[#allocation3 + $0x2c] sm:$0xf] %vm1043, %v970
        %1056 = vst.msk [vmem:[#allocation3 + $0x30] sm:$0xf] %vm1043, %v972
        %1057 = vst.msk [vmem:[#allocation3 + $0x34] sm:$0xf] %vm1043, %v974
        %1058 = vst.msk [vmem:[#allocation3 + $0x38] sm:$0xf] %vm1043, %v976
        %1059 = vst.msk [vmem:[#allocation3 + $0x3c] sm:$0xf] %vm1043, %v978
        %1060 = vst.msk [vmem:[#allocation3 + $0x40] sm:$0xf] %vm1043, %v980
        %1061 = vst.msk [vmem:[#allocation3 + $0x44] sm:$0xf] %vm1043, %v982
        %1062 = vst.msk [vmem:[#allocation3 + $0x48] sm:$0xf] %vm1043, %v984
        %1063 = vst.msk [vmem:[#allocation3 + $0x4c] sm:$0xf] %vm1043, %v986
        %1064 = vst.msk [vmem:[#allocation3 + $0x50] sm:$0xf] %vm1043, %v988
        %1065 = vst.msk [vmem:[#allocation3 + $0x54] sm:$0xf] %vm1043, %v990
        %1066 = vst.msk [vmem:[#allocation3 + $0x58] sm:$0xf] %vm1043, %v992
        %1067 = vst.msk [vmem:[#allocation3 + $0x5c] sm:$0xf] %vm1043, %v994
        %1068 = vst.msk [vmem:[#allocation3 + $0x60] sm:$0xf] %vm1043, %v996
        %1069 = vst.msk [vmem:[#allocation3 + $0x64] sm:$0xf] %vm1043, %v998
        %1070 = vst.msk [vmem:[#allocation3 + $0x68] sm:$0xf] %vm1043, %v1000
        %1071 = vst.msk [vmem:[#allocation3 + $0x6c] sm:$0xf] %vm1043, %v1002
        %1072 = vst.msk [vmem:[#allocation3 + $0x70] sm:$0xf] %vm1043, %v1004
        %1073 = vst.msk [vmem:[#allocation3 + $0x74] sm:$0xf] %vm1043, %v1006
        %1074 = vst.msk [vmem:[#allocation3 + $0x78] sm:$0xf] %vm1043, %v1008
        %1075 = vst.msk [vmem:[#allocation3 + $0x7c] sm:$0xf] %vm1043, %v1010
        %v1076 = vld [vmem:[%s271 + $0x1] sm:$0xff]
        %v1077 = vld [vmem:[%s271 + $0x9] sm:$0xff]
        %v1078 = vld [vmem:[%s271 + $0x19] sm:$0xff]
        %v1079 = vld [vmem:[%s271 + $0x21] sm:$0xff]
        %v1080 = vld [vmem:[%s271 + $0x31] sm:$0xff]
        %v1081 = vld [vmem:[%s271 + $0x39] sm:$0xff]
        %v1082 = vld [vmem:[%s271 + $0x49] sm:$0xff]
        %v1083 = vld [vmem:[%s271 + $0x51] sm:$0xff]
        %v1084 = vld [vmem:[%s271 + $0x61] sm:$0xff]
        %v1085 = vld [vmem:[%s271 + $0x69] sm:$0xff]
        %v1086 = vld [vmem:[%s271 + $0x79] sm:$0xff]
        %v1087 = vld [vmem:[%s271 + $0x81] sm:$0xff]
        %v1088 = vld [vmem:[%s271 + $0x91] sm:$0xff]
        %v1089 = vld [vmem:[%s271 + $0x99] sm:$0xff]
        %v1090 = vld [vmem:[%s271 + $0xa9] sm:$0xff]
        %v1091 = vld [vmem:[%s271 + $0xb1] sm:$0xff]
        %v1092 = vld [vmem:[%s271 + $0xc1] sm:$0xff]
        %v1093 = vld [vmem:[%s271 + $0xc9] sm:$0xff]
        %v1094 = vld [vmem:[%s271 + $0xd9] sm:$0xff]
        %v1095 = vld [vmem:[%s271 + $0xe1] sm:$0xff]
        %v1096 = vld [vmem:[%s271 + $0xf1] sm:$0xff]
        %v1097 = vld [vmem:[%s271 + $0xf9] sm:$0xff]
        %v1098 = vld [vmem:[%s271 + $0x109] sm:$0xff]
        %v1099 = vld [vmem:[%s271 + $0x111] sm:$0xff]
        %v1100 = vld [vmem:[%s271 + $0x121] sm:$0xff]
        %v1101 = vld [vmem:[%s271 + $0x129] sm:$0xff]
        %v1102 = vld [vmem:[%s271 + $0x139] sm:$0xff]
        %v1103 = vld [vmem:[%s271 + $0x141] sm:$0xff]
        %v1104 = vld [vmem:[%s271 + $0x151] sm:$0xff]
        %v1105 = vld [vmem:[%s271 + $0x159] sm:$0xff]
        %v1106 = vld [vmem:[%s271 + $0x169] sm:$0xff]
        %v1107 = vld [vmem:[%s271 + $0x171] sm:$0xff]
        %v1108 = vpack.c.bf16 %v1076, %v1076
        %v1109 = vpack.c.bf16 %v1077, %v1077
        %v1110 = vpack.c.bf16 %v1078, %v1078
        %v1111 = vpack.c.bf16 %v1079, %v1079
        %v1112 = vpack.c.bf16 %v1080, %v1080
        %v1113 = vpack.c.bf16 %v1081, %v1081
        %v1114 = vpack.c.bf16 %v1082, %v1082
        %v1115 = vpack.c.bf16 %v1083, %v1083
        %v1116 = vpack.c.bf16 %v1084, %v1084
        %v1117 = vpack.c.bf16 %v1085, %v1085
        %v1118 = vpack.c.bf16 %v1086, %v1086
        %v1119 = vpack.c.bf16 %v1087, %v1087
        %v1120 = vpack.c.bf16 %v1088, %v1088
        %v1121 = vpack.c.bf16 %v1089, %v1089
        %v1122 = vpack.c.bf16 %v1090, %v1090
        %v1123 = vpack.c.bf16 %v1091, %v1091
        %v1124 = vpack.c.bf16 %v1092, %v1092
        %v1125 = vpack.c.bf16 %v1093, %v1093
        %v1126 = vpack.c.bf16 %v1094, %v1094
        %v1127 = vpack.c.bf16 %v1095, %v1095
        %v1128 = vpack.c.bf16 %v1096, %v1096
        %v1129 = vpack.c.bf16 %v1097, %v1097
        %v1130 = vpack.c.bf16 %v1098, %v1098
        %v1131 = vpack.c.bf16 %v1099, %v1099
        %v1132 = vpack.c.bf16 %v1100, %v1100
        %v1133 = vpack.c.bf16 %v1101, %v1101
        %v1134 = vpack.c.bf16 %v1102, %v1102
        %v1135 = vpack.c.bf16 %v1103, %v1103
        %v1136 = vpack.c.bf16 %v1104, %v1104
        %v1137 = vpack.c.bf16 %v1105, %v1105
        %v1138 = vpack.c.bf16 %v1106, %v1106
        %v1139 = vpack.c.bf16 %v1107, %v1107
        %1172 = vrot.lane.b32.xlu0 %v1108, 16
        %v1173 = vpop.permute.xlu0 %1172
        %1174 = vrot.lane.b32.xlu0 %v1109, 16
        %v1175 = vpop.permute.xlu0 %1174
        %1176 = vrot.lane.b32.xlu0 %v1110, 16
        %v1177 = vpop.permute.xlu0 %1176
        %1178 = vrot.lane.b32.xlu0 %v1111, 16
        %v1179 = vpop.permute.xlu0 %1178
        %1180 = vrot.lane.b32.xlu0 %v1112, 16
        %v1181 = vpop.permute.xlu0 %1180
        %1182 = vrot.lane.b32.xlu0 %v1113, 16
        %v1183 = vpop.permute.xlu0 %1182
        %1184 = vrot.lane.b32.xlu0 %v1114, 16
        %v1185 = vpop.permute.xlu0 %1184
        %1186 = vrot.lane.b32.xlu0 %v1115, 16
        %v1187 = vpop.permute.xlu0 %1186
        %1188 = vrot.lane.b32.xlu0 %v1116, 16
        %v1189 = vpop.permute.xlu0 %1188
        %1190 = vrot.lane.b32.xlu0 %v1117, 16
        %v1191 = vpop.permute.xlu0 %1190
        %1192 = vrot.lane.b32.xlu0 %v1118, 16
        %v1193 = vpop.permute.xlu0 %1192
        %1194 = vrot.lane.b32.xlu0 %v1119, 16
        %v1195 = vpop.permute.xlu0 %1194
        %1196 = vrot.lane.b32.xlu0 %v1120, 16
        %v1197 = vpop.permute.xlu0 %1196
        %1198 = vrot.lane.b32.xlu0 %v1121, 16
        %v1199 = vpop.permute.xlu0 %1198
        %1200 = vrot.lane.b32.xlu0 %v1122, 16
        %v1201 = vpop.permute.xlu0 %1200
        %1202 = vrot.lane.b32.xlu0 %v1123, 16
        %v1203 = vpop.permute.xlu0 %1202
        %1204 = vrot.lane.b32.xlu0 %v1124, 16
        %v1205 = vpop.permute.xlu0 %1204
        %1206 = vrot.lane.b32.xlu0 %v1125, 16
        %v1207 = vpop.permute.xlu0 %1206
        %1208 = vrot.lane.b32.xlu0 %v1126, 16
        %v1209 = vpop.permute.xlu0 %1208
        %1210 = vrot.lane.b32.xlu0 %v1127, 16
        %v1211 = vpop.permute.xlu0 %1210
        %1212 = vrot.lane.b32.xlu0 %v1128, 16
        %v1213 = vpop.permute.xlu0 %1212
        %1214 = vrot.lane.b32.xlu0 %v1129, 16
        %v1215 = vpop.permute.xlu0 %1214
        %1216 = vrot.lane.b32.xlu0 %v1130, 16
        %v1217 = vpop.permute.xlu0 %1216
        %1218 = vrot.lane.b32.xlu0 %v1131, 16
        %v1219 = vpop.permute.xlu0 %1218
        %1220 = vrot.lane.b32.xlu0 %v1132, 16
        %v1221 = vpop.permute.xlu0 %1220
        %1222 = vrot.lane.b32.xlu0 %v1133, 16
        %v1223 = vpop.permute.xlu0 %1222
        %1224 = vrot.lane.b32.xlu0 %v1134, 16
        %v1225 = vpop.permute.xlu0 %1224
        %1226 = vrot.lane.b32.xlu0 %v1135, 16
        %v1227 = vpop.permute.xlu0 %1226
        %1228 = vrot.lane.b32.xlu0 %v1136, 16
        %v1229 = vpop.permute.xlu0 %1228
        %1230 = vrot.lane.b32.xlu0 %v1137, 16
        %v1231 = vpop.permute.xlu0 %1230
        %1232 = vrot.lane.b32.xlu0 %v1138, 16
        %v1233 = vpop.permute.xlu0 %1232
        %1234 = vrot.lane.b32.xlu0 %v1139, 16
        %v1235 = vpop.permute.xlu0 %1234
        %vm1268 = vcmask 158848
        %1269 = vst.msk [vmem:[#allocation3] sm:$0xf] %vm1268, %v1173
        %1270 = vst.msk [vmem:[#allocation3 + $0x4] sm:$0xf] %vm1268, %v1175
        %1271 = vst.msk [vmem:[#allocation3 + $0x8] sm:$0xf] %vm1268, %v1177
        %1272 = vst.msk [vmem:[#allocation3 + $0xc] sm:$0xf] %vm1268, %v1179
        %1273 = vst.msk [vmem:[#allocation3 + $0x10] sm:$0xf] %vm1268, %v1181
        %1274 = vst.msk [vmem:[#allocation3 + $0x14] sm:$0xf] %vm1268, %v1183
        %1275 = vst.msk [vmem:[#allocation3 + $0x18] sm:$0xf] %vm1268, %v1185
        %1276 = vst.msk [vmem:[#allocation3 + $0x1c] sm:$0xf] %vm1268, %v1187
        %1277 = vst.msk [vmem:[#allocation3 + $0x20] sm:$0xf] %vm1268, %v1189
        %1278 = vst.msk [vmem:[#allocation3 + $0x24] sm:$0xf] %vm1268, %v1191
        %1279 = vst.msk [vmem:[#allocation3 + $0x28] sm:$0xf] %vm1268, %v1193
        %1280 = vst.msk [vmem:[#allocation3 + $0x2c] sm:$0xf] %vm1268, %v1195
        %1281 = vst.msk [vmem:[#allocation3 + $0x30] sm:$0xf] %vm1268, %v1197
        %1282 = vst.msk [vmem:[#allocation3 + $0x34] sm:$0xf] %vm1268, %v1199
        %1283 = vst.msk [vmem:[#allocation3 + $0x38] sm:$0xf] %vm1268, %v1201
        %1284 = vst.msk [vmem:[#allocation3 + $0x3c] sm:$0xf] %vm1268, %v1203
        %1285 = vst.msk [vmem:[#allocation3 + $0x40] sm:$0xf] %vm1268, %v1205
        %1286 = vst.msk [vmem:[#allocation3 + $0x44] sm:$0xf] %vm1268, %v1207
        %1287 = vst.msk [vmem:[#allocation3 + $0x48] sm:$0xf] %vm1268, %v1209
        %1288 = vst.msk [vmem:[#allocation3 + $0x4c] sm:$0xf] %vm1268, %v1211
        %1289 = vst.msk [vmem:[#allocation3 + $0x50] sm:$0xf] %vm1268, %v1213
        %1290 = vst.msk [vmem:[#allocation3 + $0x54] sm:$0xf] %vm1268, %v1215
        %1291 = vst.msk [vmem:[#allocation3 + $0x58] sm:$0xf] %vm1268, %v1217
        %1292 = vst.msk [vmem:[#allocation3 + $0x5c] sm:$0xf] %vm1268, %v1219
        %1293 = vst.msk [vmem:[#allocation3 + $0x60] sm:$0xf] %vm1268, %v1221
        %1294 = vst.msk [vmem:[#allocation3 + $0x64] sm:$0xf] %vm1268, %v1223
        %1295 = vst.msk [vmem:[#allocation3 + $0x68] sm:$0xf] %vm1268, %v1225
        %1296 = vst.msk [vmem:[#allocation3 + $0x6c] sm:$0xf] %vm1268, %v1227
        %1297 = vst.msk [vmem:[#allocation3 + $0x70] sm:$0xf] %vm1268, %v1229
        %1298 = vst.msk [vmem:[#allocation3 + $0x74] sm:$0xf] %vm1268, %v1231
        %1299 = vst.msk [vmem:[#allocation3 + $0x78] sm:$0xf] %vm1268, %v1233
        %1300 = vst.msk [vmem:[#allocation3 + $0x7c] sm:$0xf] %vm1268, %v1235
        %v1301 = vld [vmem:[%s271 + $0x2] sm:$0xff]
        %v1302 = vld [vmem:[%s271 + $0xa] sm:$0xff]
        %v1303 = vld [vmem:[%s271 + $0x1a] sm:$0xff]
        %v1304 = vld [vmem:[%s271 + $0x22] sm:$0xff]
        %v1305 = vld [vmem:[%s271 + $0x32] sm:$0xff]
        %v1306 = vld [vmem:[%s271 + $0x3a] sm:$0xff]
        %v1307 = vld [vmem:[%s271 + $0x4a] sm:$0xff]
        %v1308 = vld [vmem:[%s271 + $0x52] sm:$0xff]
        %v1309 = vld [vmem:[%s271 + $0x62] sm:$0xff]
        %v1310 = vld [vmem:[%s271 + $0x6a] sm:$0xff]
        %v1311 = vld [vmem:[%s271 + $0x7a] sm:$0xff]
        %v1312 = vld [vmem:[%s271 + $0x82] sm:$0xff]
        %v1313 = vld [vmem:[%s271 + $0x92] sm:$0xff]
        %v1314 = vld [vmem:[%s271 + $0x9a] sm:$0xff]
        %v1315 = vld [vmem:[%s271 + $0xaa] sm:$0xff]
        %v1316 = vld [vmem:[%s271 + $0xb2] sm:$0xff]
        %v1317 = vld [vmem:[%s271 + $0xc2] sm:$0xff]
        %v1318 = vld [vmem:[%s271 + $0xca] sm:$0xff]
        %v1319 = vld [vmem:[%s271 + $0xda] sm:$0xff]
        %v1320 = vld [vmem:[%s271 + $0xe2] sm:$0xff]
        %v1321 = vld [vmem:[%s271 + $0xf2] sm:$0xff]
        %v1322 = vld [vmem:[%s271 + $0xfa] sm:$0xff]
        %v1323 = vld [vmem:[%s271 + $0x10a] sm:$0xff]
        %v1324 = vld [vmem:[%s271 + $0x112] sm:$0xff]
        %v1325 = vld [vmem:[%s271 + $0x122] sm:$0xff]
        %v1326 = vld [vmem:[%s271 + $0x12a] sm:$0xff]
        %v1327 = vld [vmem:[%s271 + $0x13a] sm:$0xff]
        %v1328 = vld [vmem:[%s271 + $0x142] sm:$0xff]
        %v1329 = vld [vmem:[%s271 + $0x152] sm:$0xff]
        %v1330 = vld [vmem:[%s271 + $0x15a] sm:$0xff]
        %v1331 = vld [vmem:[%s271 + $0x16a] sm:$0xff]
        %v1332 = vld [vmem:[%s271 + $0x172] sm:$0xff]
        %v1333 = vpack.c.bf16 %v1301, %v1301
        %v1334 = vpack.c.bf16 %v1302, %v1302
        %v1335 = vpack.c.bf16 %v1303, %v1303
        %v1336 = vpack.c.bf16 %v1304, %v1304
        %v1337 = vpack.c.bf16 %v1305, %v1305
        %v1338 = vpack.c.bf16 %v1306, %v1306
        %v1339 = vpack.c.bf16 %v1307, %v1307
        %v1340 = vpack.c.bf16 %v1308, %v1308
        %v1341 = vpack.c.bf16 %v1309, %v1309
        %v1342 = vpack.c.bf16 %v1310, %v1310
        %v1343 = vpack.c.bf16 %v1311, %v1311
        %v1344 = vpack.c.bf16 %v1312, %v1312
        %v1345 = vpack.c.bf16 %v1313, %v1313
        %v1346 = vpack.c.bf16 %v1314, %v1314
        %v1347 = vpack.c.bf16 %v1315, %v1315
        %v1348 = vpack.c.bf16 %v1316, %v1316
        %v1349 = vpack.c.bf16 %v1317, %v1317
        %v1350 = vpack.c.bf16 %v1318, %v1318
        %v1351 = vpack.c.bf16 %v1319, %v1319
        %v1352 = vpack.c.bf16 %v1320, %v1320
        %v1353 = vpack.c.bf16 %v1321, %v1321
        %v1354 = vpack.c.bf16 %v1322, %v1322
        %v1355 = vpack.c.bf16 %v1323, %v1323
        %v1356 = vpack.c.bf16 %v1324, %v1324
        %v1357 = vpack.c.bf16 %v1325, %v1325
        %v1358 = vpack.c.bf16 %v1326, %v1326
        %v1359 = vpack.c.bf16 %v1327, %v1327
        %v1360 = vpack.c.bf16 %v1328, %v1328
        %v1361 = vpack.c.bf16 %v1329, %v1329
        %v1362 = vpack.c.bf16 %v1330, %v1330
        %v1363 = vpack.c.bf16 %v1331, %v1331
        %v1364 = vpack.c.bf16 %v1332, %v1332
        %1397 = vrot.lane.b32.xlu0 %v1333, 20
        %v1398 = vpop.permute.xlu0 %1397
        %1399 = vrot.lane.b32.xlu0 %v1334, 20
        %v1400 = vpop.permute.xlu0 %1399
        %1401 = vrot.lane.b32.xlu0 %v1335, 20
        %v1402 = vpop.permute.xlu0 %1401
        %1403 = vrot.lane.b32.xlu0 %v1336, 20
        %v1404 = vpop.permute.xlu0 %1403
        %1405 = vrot.lane.b32.xlu0 %v1337, 20
        %v1406 = vpop.permute.xlu0 %1405
        %1407 = vrot.lane.b32.xlu0 %v1338, 20
        %v1408 = vpop.permute.xlu0 %1407
        %1409 = vrot.lane.b32.xlu0 %v1339, 20
        %v1410 = vpop.permute.xlu0 %1409
        %1411 = vrot.lane.b32.xlu0 %v1340, 20
        %v1412 = vpop.permute.xlu0 %1411
        %1413 = vrot.lane.b32.xlu0 %v1341, 20
        %v1414 = vpop.permute.xlu0 %1413
        %1415 = vrot.lane.b32.xlu0 %v1342, 20
        %v1416 = vpop.permute.xlu0 %1415
        %1417 = vrot.lane.b32.xlu0 %v1343, 20
        %v1418 = vpop.permute.xlu0 %1417
        %1419 = vrot.lane.b32.xlu0 %v1344, 20
        %v1420 = vpop.permute.xlu0 %1419
        %1421 = vrot.lane.b32.xlu0 %v1345, 20
        %v1422 = vpop.permute.xlu0 %1421
        %1423 = vrot.lane.b32.xlu0 %v1346, 20
        %v1424 = vpop.permute.xlu0 %1423
        %1425 = vrot.lane.b32.xlu0 %v1347, 20
        %v1426 = vpop.permute.xlu0 %1425
        %1427 = vrot.lane.b32.xlu0 %v1348, 20
        %v1428 = vpop.permute.xlu0 %1427
        %1429 = vrot.lane.b32.xlu0 %v1349, 20
        %v1430 = vpop.permute.xlu0 %1429
        %1431 = vrot.lane.b32.xlu0 %v1350, 20
        %v1432 = vpop.permute.xlu0 %1431
        %1433 = vrot.lane.b32.xlu0 %v1351, 20
        %v1434 = vpop.permute.xlu0 %1433
        %1435 = vrot.lane.b32.xlu0 %v1352, 20
        %v1436 = vpop.permute.xlu0 %1435
        %1437 = vrot.lane.b32.xlu0 %v1353, 20
        %v1438 = vpop.permute.xlu0 %1437
        %1439 = vrot.lane.b32.xlu0 %v1354, 20
        %v1440 = vpop.permute.xlu0 %1439
        %1441 = vrot.lane.b32.xlu0 %v1355, 20
        %v1442 = vpop.permute.xlu0 %1441
        %1443 = vrot.lane.b32.xlu0 %v1356, 20
        %v1444 = vpop.permute.xlu0 %1443
        %1445 = vrot.lane.b32.xlu0 %v1357, 20
        %v1446 = vpop.permute.xlu0 %1445
        %1447 = vrot.lane.b32.xlu0 %v1358, 20
        %v1448 = vpop.permute.xlu0 %1447
        %1449 = vrot.lane.b32.xlu0 %v1359, 20
        %v1450 = vpop.permute.xlu0 %1449
        %1451 = vrot.lane.b32.xlu0 %v1360, 20
        %v1452 = vpop.permute.xlu0 %1451
        %1453 = vrot.lane.b32.xlu0 %v1361, 20
        %v1454 = vpop.permute.xlu0 %1453
        %1455 = vrot.lane.b32.xlu0 %v1362, 20
        %v1456 = vpop.permute.xlu0 %1455
        %1457 = vrot.lane.b32.xlu0 %v1363, 20
        %v1458 = vpop.permute.xlu0 %1457
        %1459 = vrot.lane.b32.xlu0 %v1364, 20
        %v1460 = vpop.permute.xlu0 %1459
        %vm1493 = vcmask 191648
        %1494 = vst.msk [vmem:[#allocation3] sm:$0xf] %vm1493, %v1398
        %1495 = vst.msk [vmem:[#allocation3 + $0x4] sm:$0xf] %vm1493, %v1400
        %1496 = vst.msk [vmem:[#allocation3 + $0x8] sm:$0xf] %vm1493, %v1402
        %1497 = vst.msk [vmem:[#allocation3 + $0xc] sm:$0xf] %vm1493, %v1404
        %1498 = vst.msk [vmem:[#allocation3 + $0x10] sm:$0xf] %vm1493, %v1406
        %1499 = vst.msk [vmem:[#allocation3 + $0x14] sm:$0xf] %vm1493, %v1408
        %1500 = vst.msk [vmem:[#allocation3 + $0x18] sm:$0xf] %vm1493, %v1410
        %1501 = vst.msk [vmem:[#allocation3 + $0x1c] sm:$0xf] %vm1493, %v1412
        %1502 = vst.msk [vmem:[#allocation3 + $0x20] sm:$0xf] %vm1493, %v1414
        %1503 = vst.msk [vmem:[#allocation3 + $0x24] sm:$0xf] %vm1493, %v1416
        %1504 = vst.msk [vmem:[#allocation3 + $0x28] sm:$0xf] %vm1493, %v1418
        %1505 = vst.msk [vmem:[#allocation3 + $0x2c] sm:$0xf] %vm1493, %v1420
        %1506 = vst.msk [vmem:[#allocation3 + $0x30] sm:$0xf] %vm1493, %v1422
        %1507 = vst.msk [vmem:[#allocation3 + $0x34] sm:$0xf] %vm1493, %v1424
        %1508 = vst.msk [vmem:[#allocation3 + $0x38] sm:$0xf] %vm1493, %v1426
        %1509 = vst.msk [vmem:[#allocation3 + $0x3c] sm:$0xf] %vm1493, %v1428
        %1510 = vst.msk [vmem:[#allocation3 + $0x40] sm:$0xf] %vm1493, %v1430
        %1511 = vst.msk [vmem:[#allocation3 + $0x44] sm:$0xf] %vm1493, %v1432
        %1512 = vst.msk [vmem:[#allocation3 + $0x48] sm:$0xf] %vm1493, %v1434
        %1513 = vst.msk [vmem:[#allocation3 + $0x4c] sm:$0xf] %vm1493, %v1436
        %1514 = vst.msk [vmem:[#allocation3 + $0x50] sm:$0xf] %vm1493, %v1438
        %1515 = vst.msk [vmem:[#allocation3 + $0x54] sm:$0xf] %vm1493, %v1440
        %1516 = vst.msk [vmem:[#allocation3 + $0x58] sm:$0xf] %vm1493, %v1442
        %1517 = vst.msk [vmem:[#allocation3 + $0x5c] sm:$0xf] %vm1493, %v1444
        %1518 = vst.msk [vmem:[#allocation3 + $0x60] sm:$0xf] %vm1493, %v1446
        %1519 = vst.msk [vmem:[#allocation3 + $0x64] sm:$0xf] %vm1493, %v1448
        %1520 = vst.msk [vmem:[#allocation3 + $0x68] sm:$0xf] %vm1493, %v1450
        %1521 = vst.msk [vmem:[#allocation3 + $0x6c] sm:$0xf] %vm1493, %v1452
        %1522 = vst.msk [vmem:[#allocation3 + $0x70] sm:$0xf] %vm1493, %v1454
        %1523 = vst.msk [vmem:[#allocation3 + $0x74] sm:$0xf] %vm1493, %v1456
        %1524 = vst.msk [vmem:[#allocation3 + $0x78] sm:$0xf] %vm1493, %v1458
        %1525 = vst.msk [vmem:[#allocation3 + $0x7c] sm:$0xf] %vm1493, %v1460
        %s1526 = scalar_lea.vmem [#allocation2], 48
        %v1527 = vld [vmem:[%s1526] sm:$0xff]
        %v1528 = vld [vmem:[%s1526 + $0x8] sm:$0xff]
        %v1529 = vld [vmem:[%s1526 + $0x18] sm:$0xff]
        %v1530 = vld [vmem:[%s1526 + $0x20] sm:$0xff]
        %v1531 = vld [vmem:[%s1526 + $0x30] sm:$0xff]
        %v1532 = vld [vmem:[%s1526 + $0x38] sm:$0xff]
        %v1533 = vld [vmem:[%s1526 + $0x48] sm:$0xff]
        %v1534 = vld [vmem:[%s1526 + $0x50] sm:$0xff]
        %v1535 = vld [vmem:[%s1526 + $0x60] sm:$0xff]
        %v1536 = vld [vmem:[%s1526 + $0x68] sm:$0xff]
        %v1537 = vld [vmem:[%s1526 + $0x78] sm:$0xff]
        %v1538 = vld [vmem:[%s1526 + $0x80] sm:$0xff]
        %v1539 = vld [vmem:[%s1526 + $0x90] sm:$0xff]
        %v1540 = vld [vmem:[%s1526 + $0x98] sm:$0xff]
        %v1541 = vld [vmem:[%s1526 + $0xa8] sm:$0xff]
        %v1542 = vld [vmem:[%s1526 + $0xb0] sm:$0xff]
        %v1543 = vld [vmem:[%s1526 + $0xc0] sm:$0xff]
        %v1544 = vld [vmem:[%s1526 + $0xc8] sm:$0xff]
        %v1545 = vld [vmem:[%s1526 + $0xd8] sm:$0xff]
        %v1546 = vld [vmem:[%s1526 + $0xe0] sm:$0xff]
        %v1547 = vld [vmem:[%s1526 + $0xf0] sm:$0xff]
        %v1548 = vld [vmem:[%s1526 + $0xf8] sm:$0xff]
        %v1549 = vld [vmem:[%s1526 + $0x108] sm:$0xff]
        %v1550 = vld [vmem:[%s1526 + $0x110] sm:$0xff]
        %v1551 = vld [vmem:[%s1526 + $0x120] sm:$0xff]
        %v1552 = vld [vmem:[%s1526 + $0x128] sm:$0xff]
        %v1553 = vld [vmem:[%s1526 + $0x138] sm:$0xff]
        %v1554 = vld [vmem:[%s1526 + $0x140] sm:$0xff]
        %v1555 = vld [vmem:[%s1526 + $0x150] sm:$0xff]
        %v1556 = vld [vmem:[%s1526 + $0x158] sm:$0xff]
        %v1557 = vld [vmem:[%s1526 + $0x168] sm:$0xff]
        %v1558 = vld [vmem:[%s1526 + $0x170] sm:$0xff]
        %v1559 = vpack.c.bf16 %v1527, %v1527
        %v1560 = vpack.c.bf16 %v1528, %v1528
        %v1561 = vpack.c.bf16 %v1529, %v1529
        %v1562 = vpack.c.bf16 %v1530, %v1530
        %v1563 = vpack.c.bf16 %v1531, %v1531
        %v1564 = vpack.c.bf16 %v1532, %v1532
        %v1565 = vpack.c.bf16 %v1533, %v1533
        %v1566 = vpack.c.bf16 %v1534, %v1534
        %v1567 = vpack.c.bf16 %v1535, %v1535
        %v1568 = vpack.c.bf16 %v1536, %v1536
        %v1569 = vpack.c.bf16 %v1537, %v1537
        %v1570 = vpack.c.bf16 %v1538, %v1538
        %v1571 = vpack.c.bf16 %v1539, %v1539
        %v1572 = vpack.c.bf16 %v1540, %v1540
        %v1573 = vpack.c.bf16 %v1541, %v1541
        %v1574 = vpack.c.bf16 %v1542, %v1542
        %v1575 = vpack.c.bf16 %v1543, %v1543
        %v1576 = vpack.c.bf16 %v1544, %v1544
        %v1577 = vpack.c.bf16 %v1545, %v1545
        %v1578 = vpack.c.bf16 %v1546, %v1546
        %v1579 = vpack.c.bf16 %v1547, %v1547
        %v1580 = vpack.c.bf16 %v1548, %v1548
        %v1581 = vpack.c.bf16 %v1549, %v1549
        %v1582 = vpack.c.bf16 %v1550, %v1550
        %v1583 = vpack.c.bf16 %v1551, %v1551
        %v1584 = vpack.c.bf16 %v1552, %v1552
        %v1585 = vpack.c.bf16 %v1553, %v1553
        %v1586 = vpack.c.bf16 %v1554, %v1554
        %v1587 = vpack.c.bf16 %v1555, %v1555
        %v1588 = vpack.c.bf16 %v1556, %v1556
        %v1589 = vpack.c.bf16 %v1557, %v1557
        %v1590 = vpack.c.bf16 %v1558, %v1558
        %1623 = vrot.lane.b32.xlu0 %v1559, 24
        %v1624 = vpop.permute.xlu0 %1623
        %1625 = vrot.lane.b32.xlu0 %v1560, 24
        %v1626 = vpop.permute.xlu0 %1625
        %1627 = vrot.lane.b32.xlu0 %v1561, 24
        %v1628 = vpop.permute.xlu0 %1627
        %1629 = vrot.lane.b32.xlu0 %v1562, 24
        %v1630 = vpop.permute.xlu0 %1629
        %1631 = vrot.lane.b32.xlu0 %v1563, 24
        %v1632 = vpop.permute.xlu0 %1631
        %1633 = vrot.lane.b32.xlu0 %v1564, 24
        %v1634 = vpop.permute.xlu0 %1633
        %1635 = vrot.lane.b32.xlu0 %v1565, 24
        %v1636 = vpop.permute.xlu0 %1635
        %1637 = vrot.lane.b32.xlu0 %v1566, 24
        %v1638 = vpop.permute.xlu0 %1637
        %1639 = vrot.lane.b32.xlu0 %v1567, 24
        %v1640 = vpop.permute.xlu0 %1639
        %1641 = vrot.lane.b32.xlu0 %v1568, 24
        %v1642 = vpop.permute.xlu0 %1641
        %1643 = vrot.lane.b32.xlu0 %v1569, 24
        %v1644 = vpop.permute.xlu0 %1643
        %1645 = vrot.lane.b32.xlu0 %v1570, 24
        %v1646 = vpop.permute.xlu0 %1645
        %1647 = vrot.lane.b32.xlu0 %v1571, 24
        %v1648 = vpop.permute.xlu0 %1647
        %1649 = vrot.lane.b32.xlu0 %v1572, 24
        %v1650 = vpop.permute.xlu0 %1649
        %1651 = vrot.lane.b32.xlu0 %v1573, 24
        %v1652 = vpop.permute.xlu0 %1651
        %1653 = vrot.lane.b32.xlu0 %v1574, 24
        %v1654 = vpop.permute.xlu0 %1653
        %1655 = vrot.lane.b32.xlu0 %v1575, 24
        %v1656 = vpop.permute.xlu0 %1655
        %1657 = vrot.lane.b32.xlu0 %v1576, 24
        %v1658 = vpop.permute.xlu0 %1657
        %1659 = vrot.lane.b32.xlu0 %v1577, 24
        %v1660 = vpop.permute.xlu0 %1659
        %1661 = vrot.lane.b32.xlu0 %v1578, 24
        %v1662 = vpop.permute.xlu0 %1661
        %1663 = vrot.lane.b32.xlu0 %v1579, 24
        %v1664 = vpop.permute.xlu0 %1663
        %1665 = vrot.lane.b32.xlu0 %v1580, 24
        %v1666 = vpop.permute.xlu0 %1665
        %1667 = vrot.lane.b32.xlu0 %v1581, 24
        %v1668 = vpop.permute.xlu0 %1667
        %1669 = vrot.lane.b32.xlu0 %v1582, 24
        %v1670 = vpop.permute.xlu0 %1669
        %1671 = vrot.lane.b32.xlu0 %v1583, 24
        %v1672 = vpop.permute.xlu0 %1671
        %1673 = vrot.lane.b32.xlu0 %v1584, 24
        %v1674 = vpop.permute.xlu0 %1673
        %1675 = vrot.lane.b32.xlu0 %v1585, 24
        %v1676 = vpop.permute.xlu0 %1675
        %1677 = vrot.lane.b32.xlu0 %v1586, 24
        %v1678 = vpop.permute.xlu0 %1677
        %1679 = vrot.lane.b32.xlu0 %v1587, 24
        %v1680 = vpop.permute.xlu0 %1679
        %1681 = vrot.lane.b32.xlu0 %v1588, 24
        %v1682 = vpop.permute.xlu0 %1681
        %1683 = vrot.lane.b32.xlu0 %v1589, 24
        %v1684 = vpop.permute.xlu0 %1683
        %1685 = vrot.lane.b32.xlu0 %v1590, 24
        %v1686 = vpop.permute.xlu0 %1685
        %vm1719 = vcmask 224448
        %1720 = vst.msk [vmem:[#allocation3] sm:$0xf] %vm1719, %v1624
        %1721 = vst.msk [vmem:[#allocation3 + $0x4] sm:$0xf] %vm1719, %v1626
        %1722 = vst.msk [vmem:[#allocation3 + $0x8] sm:$0xf] %vm1719, %v1628
        %1723 = vst.msk [vmem:[#allocation3 + $0xc] sm:$0xf] %vm1719, %v1630
        %1724 = vst.msk [vmem:[#allocation3 + $0x10] sm:$0xf] %vm1719, %v1632
        %1725 = vst.msk [vmem:[#allocation3 + $0x14] sm:$0xf] %vm1719, %v1634
        %1726 = vst.msk [vmem:[#allocation3 + $0x18] sm:$0xf] %vm1719, %v1636
        %1727 = vst.msk [vmem:[#allocation3 + $0x1c] sm:$0xf] %vm1719, %v1638
        %1728 = vst.msk [vmem:[#allocation3 + $0x20] sm:$0xf] %vm1719, %v1640
        %1729 = vst.msk [vmem:[#allocation3 + $0x24] sm:$0xf] %vm1719, %v1642
        %1730 = vst.msk [vmem:[#allocation3 + $0x28] sm:$0xf] %vm1719, %v1644
        %1731 = vst.msk [vmem:[#allocation3 + $0x2c] sm:$0xf] %vm1719, %v1646
        %1732 = vst.msk [vmem:[#allocation3 + $0x30] sm:$0xf] %vm1719, %v1648
        %1733 = vst.msk [vmem:[#allocation3 + $0x34] sm:$0xf] %vm1719, %v1650
        %1734 = vst.msk [vmem:[#allocation3 + $0x38] sm:$0xf] %vm1719, %v1652
        %1735 = vst.msk [vmem:[#allocation3 + $0x3c] sm:$0xf] %vm1719, %v1654
        %1736 = vst.msk [vmem:[#allocation3 + $0x40] sm:$0xf] %vm1719, %v1656
        %1737 = vst.msk [vmem:[#allocation3 + $0x44] sm:$0xf] %vm1719, %v1658
        %1738 = vst.msk [vmem:[#allocation3 + $0x48] sm:$0xf] %vm1719, %v1660
        %1739 = vst.msk [vmem:[#allocation3 + $0x4c] sm:$0xf] %vm1719, %v1662
        %1740 = vst.msk [vmem:[#allocation3 + $0x50] sm:$0xf] %vm1719, %v1664
        %1741 = vst.msk [vmem:[#allocation3 + $0x54] sm:$0xf] %vm1719, %v1666
        %1742 = vst.msk [vmem:[#allocation3 + $0x58] sm:$0xf] %vm1719, %v1668
        %1743 = vst.msk [vmem:[#allocation3 + $0x5c] sm:$0xf] %vm1719, %v1670
        %1744 = vst.msk [vmem:[#allocation3 + $0x60] sm:$0xf] %vm1719, %v1672
        %1745 = vst.msk [vmem:[#allocation3 + $0x64] sm:$0xf] %vm1719, %v1674
        %1746 = vst.msk [vmem:[#allocation3 + $0x68] sm:$0xf] %vm1719, %v1676
        %1747 = vst.msk [vmem:[#allocation3 + $0x6c] sm:$0xf] %vm1719, %v1678
        %1748 = vst.msk [vmem:[#allocation3 + $0x70] sm:$0xf] %vm1719, %v1680
        %1749 = vst.msk [vmem:[#allocation3 + $0x74] sm:$0xf] %vm1719, %v1682
        %1750 = vst.msk [vmem:[#allocation3 + $0x78] sm:$0xf] %vm1719, %v1684
        %1751 = vst.msk [vmem:[#allocation3 + $0x7c] sm:$0xf] %vm1719, %v1686
        %v1752 = vld [vmem:[%s1526 + $0x1] sm:$0xff]
        %v1753 = vld [vmem:[%s1526 + $0x9] sm:$0xff]
        %v1754 = vld [vmem:[%s1526 + $0x19] sm:$0xff]
        %v1755 = vld [vmem:[%s1526 + $0x21] sm:$0xff]
        %v1756 = vld [vmem:[%s1526 + $0x31] sm:$0xff]
        %v1757 = vld [vmem:[%s1526 + $0x39] sm:$0xff]
        %v1758 = vld [vmem:[%s1526 + $0x49] sm:$0xff]
        %v1759 = vld [vmem:[%s1526 + $0x51] sm:$0xff]
        %v1760 = vld [vmem:[%s1526 + $0x61] sm:$0xff]
        %v1761 = vld [vmem:[%s1526 + $0x69] sm:$0xff]
        %v1762 = vld [vmem:[%s1526 + $0x79] sm:$0xff]
        %v1763 = vld [vmem:[%s1526 + $0x81] sm:$0xff]
        %v1764 = vld [vmem:[%s1526 + $0x91] sm:$0xff]
        %v1765 = vld [vmem:[%s1526 + $0x99] sm:$0xff]
        %v1766 = vld [vmem:[%s1526 + $0xa9] sm:$0xff]
        %v1767 = vld [vmem:[%s1526 + $0xb1] sm:$0xff]
        %v1768 = vld [vmem:[%s1526 + $0xc1] sm:$0xff]
        %v1769 = vld [vmem:[%s1526 + $0xc9] sm:$0xff]
        %v1770 = vld [vmem:[%s1526 + $0xd9] sm:$0xff]
        %v1771 = vld [vmem:[%s1526 + $0xe1] sm:$0xff]
        %v1772 = vld [vmem:[%s1526 + $0xf1] sm:$0xff]
        %v1773 = vld [vmem:[%s1526 + $0xf9] sm:$0xff]
        %v1774 = vld [vmem:[%s1526 + $0x109] sm:$0xff]
        %v1775 = vld [vmem:[%s1526 + $0x111] sm:$0xff]
        %v1776 = vld [vmem:[%s1526 + $0x121] sm:$0xff]
        %v1777 = vld [vmem:[%s1526 + $0x129] sm:$0xff]
        %v1778 = vld [vmem:[%s1526 + $0x139] sm:$0xff]
        %v1779 = vld [vmem:[%s1526 + $0x141] sm:$0xff]
        %v1780 = vld [vmem:[%s1526 + $0x151] sm:$0xff]
        %v1781 = vld [vmem:[%s1526 + $0x159] sm:$0xff]
        %v1782 = vld [vmem:[%s1526 + $0x169] sm:$0xff]
        %v1783 = vld [vmem:[%s1526 + $0x171] sm:$0xff]
        %v1784 = vpack.c.bf16 %v1752, %v1752
        %v1785 = vpack.c.bf16 %v1753, %v1753
        %v1786 = vpack.c.bf16 %v1754, %v1754
        %v1787 = vpack.c.bf16 %v1755, %v1755
        %v1788 = vpack.c.bf16 %v1756, %v1756
        %v1789 = vpack.c.bf16 %v1757, %v1757
        %v1790 = vpack.c.bf16 %v1758, %v1758
        %v1791 = vpack.c.bf16 %v1759, %v1759
        %v1792 = vpack.c.bf16 %v1760, %v1760
        %v1793 = vpack.c.bf16 %v1761, %v1761
        %v1794 = vpack.c.bf16 %v1762, %v1762
        %v1795 = vpack.c.bf16 %v1763, %v1763
        %v1796 = vpack.c.bf16 %v1764, %v1764
        %v1797 = vpack.c.bf16 %v1765, %v1765
        %v1798 = vpack.c.bf16 %v1766, %v1766
        %v1799 = vpack.c.bf16 %v1767, %v1767
        %v1800 = vpack.c.bf16 %v1768, %v1768
        %v1801 = vpack.c.bf16 %v1769, %v1769
        %v1802 = vpack.c.bf16 %v1770, %v1770
        %v1803 = vpack.c.bf16 %v1771, %v1771
        %v1804 = vpack.c.bf16 %v1772, %v1772
        %v1805 = vpack.c.bf16 %v1773, %v1773
        %v1806 = vpack.c.bf16 %v1774, %v1774
        %v1807 = vpack.c.bf16 %v1775, %v1775
        %v1808 = vpack.c.bf16 %v1776, %v1776
        %v1809 = vpack.c.bf16 %v1777, %v1777
        %v1810 = vpack.c.bf16 %v1778, %v1778
        %v1811 = vpack.c.bf16 %v1779, %v1779
        %v1812 = vpack.c.bf16 %v1780, %v1780
        %v1813 = vpack.c.bf16 %v1781, %v1781
        %v1814 = vpack.c.bf16 %v1782, %v1782
        %v1815 = vpack.c.bf16 %v1783, %v1783
        %1848 = vrot.lane.b32.xlu0 %v1784, 28
        %v1849 = vpop.permute.xlu0 %1848
        %1850 = vrot.lane.b32.xlu0 %v1785, 28
        %v1851 = vpop.permute.xlu0 %1850
        %1852 = vrot.lane.b32.xlu0 %v1786, 28
        %v1853 = vpop.permute.xlu0 %1852
        %1854 = vrot.lane.b32.xlu0 %v1787, 28
        %v1855 = vpop.permute.xlu0 %1854
        %1856 = vrot.lane.b32.xlu0 %v1788, 28
        %v1857 = vpop.permute.xlu0 %1856
        %1858 = vrot.lane.b32.xlu0 %v1789, 28
        %v1859 = vpop.permute.xlu0 %1858
        %1860 = vrot.lane.b32.xlu0 %v1790, 28
        %v1861 = vpop.permute.xlu0 %1860
        %1862 = vrot.lane.b32.xlu0 %v1791, 28
        %v1863 = vpop.permute.xlu0 %1862
        %1864 = vrot.lane.b32.xlu0 %v1792, 28
        %v1865 = vpop.permute.xlu0 %1864
        %1866 = vrot.lane.b32.xlu0 %v1793, 28
        %v1867 = vpop.permute.xlu0 %1866
        %1868 = vrot.lane.b32.xlu0 %v1794, 28
        %v1869 = vpop.permute.xlu0 %1868
        %1870 = vrot.lane.b32.xlu0 %v1795, 28
        %v1871 = vpop.permute.xlu0 %1870
        %1872 = vrot.lane.b32.xlu0 %v1796, 28
        %v1873 = vpop.permute.xlu0 %1872
        %1874 = vrot.lane.b32.xlu0 %v1797, 28
        %v1875 = vpop.permute.xlu0 %1874
        %1876 = vrot.lane.b32.xlu0 %v1798, 28
        %v1877 = vpop.permute.xlu0 %1876
        %1878 = vrot.lane.b32.xlu0 %v1799, 28
        %v1879 = vpop.permute.xlu0 %1878
        %1880 = vrot.lane.b32.xlu0 %v1800, 28
        %v1881 = vpop.permute.xlu0 %1880
        %1882 = vrot.lane.b32.xlu0 %v1801, 28
        %v1883 = vpop.permute.xlu0 %1882
        %1884 = vrot.lane.b32.xlu0 %v1802, 28
        %v1885 = vpop.permute.xlu0 %1884
        %1886 = vrot.lane.b32.xlu0 %v1803, 28
        %v1887 = vpop.permute.xlu0 %1886
        %1888 = vrot.lane.b32.xlu0 %v1804, 28
        %v1889 = vpop.permute.xlu0 %1888
        %1890 = vrot.lane.b32.xlu0 %v1805, 28
        %v1891 = vpop.permute.xlu0 %1890
        %1892 = vrot.lane.b32.xlu0 %v1806, 28
        %v1893 = vpop.permute.xlu0 %1892
        %1894 = vrot.lane.b32.xlu0 %v1807, 28
        %v1895 = vpop.permute.xlu0 %1894
        %1896 = vrot.lane.b32.xlu0 %v1808, 28
        %v1897 = vpop.permute.xlu0 %1896
        %1898 = vrot.lane.b32.xlu0 %v1809, 28
        %v1899 = vpop.permute.xlu0 %1898
        %1900 = vrot.lane.b32.xlu0 %v1810, 28
        %v1901 = vpop.permute.xlu0 %1900
        %1902 = vrot.lane.b32.xlu0 %v1811, 28
        %v1903 = vpop.permute.xlu0 %1902
        %1904 = vrot.lane.b32.xlu0 %v1812, 28
        %v1905 = vpop.permute.xlu0 %1904
        %1906 = vrot.lane.b32.xlu0 %v1813, 28
        %v1907 = vpop.permute.xlu0 %1906
        %1908 = vrot.lane.b32.xlu0 %v1814, 28
        %v1909 = vpop.permute.xlu0 %1908
        %1910 = vrot.lane.b32.xlu0 %v1815, 28
        %v1911 = vpop.permute.xlu0 %1910
        %vm1944 = vcmask 257248
        %1945 = vst.msk [vmem:[#allocation3] sm:$0xf] %vm1944, %v1849
        %1946 = vst.msk [vmem:[#allocation3 + $0x4] sm:$0xf] %vm1944, %v1851
        %1947 = vst.msk [vmem:[#allocation3 + $0x8] sm:$0xf] %vm1944, %v1853
        %1948 = vst.msk [vmem:[#allocation3 + $0xc] sm:$0xf] %vm1944, %v1855
        %1949 = vst.msk [vmem:[#allocation3 + $0x10] sm:$0xf] %vm1944, %v1857
        %1950 = vst.msk [vmem:[#allocation3 + $0x14] sm:$0xf] %vm1944, %v1859
        %1951 = vst.msk [vmem:[#allocation3 + $0x18] sm:$0xf] %vm1944, %v1861
        %1952 = vst.msk [vmem:[#allocation3 + $0x1c] sm:$0xf] %vm1944, %v1863
        %1953 = vst.msk [vmem:[#allocation3 + $0x20] sm:$0xf] %vm1944, %v1865
        %1954 = vst.msk [vmem:[#allocation3 + $0x24] sm:$0xf] %vm1944, %v1867
        %1955 = vst.msk [vmem:[#allocation3 + $0x28] sm:$0xf] %vm1944, %v1869
        %1956 = vst.msk [vmem:[#allocation3 + $0x2c] sm:$0xf] %vm1944, %v1871
        %1957 = vst.msk [vmem:[#allocation3 + $0x30] sm:$0xf] %vm1944, %v1873
        %1958 = vst.msk [vmem:[#allocation3 + $0x34] sm:$0xf] %vm1944, %v1875
        %1959 = vst.msk [vmem:[#allocation3 + $0x38] sm:$0xf] %vm1944, %v1877
        %1960 = vst.msk [vmem:[#allocation3 + $0x3c] sm:$0xf] %vm1944, %v1879
        %1961 = vst.msk [vmem:[#allocation3 + $0x40] sm:$0xf] %vm1944, %v1881
        %1962 = vst.msk [vmem:[#allocation3 + $0x44] sm:$0xf] %vm1944, %v1883
        %1963 = vst.msk [vmem:[#allocation3 + $0x48] sm:$0xf] %vm1944, %v1885
        %1964 = vst.msk [vmem:[#allocation3 + $0x4c] sm:$0xf] %vm1944, %v1887
        %1965 = vst.msk [vmem:[#allocation3 + $0x50] sm:$0xf] %vm1944, %v1889
        %1966 = vst.msk [vmem:[#allocation3 + $0x54] sm:$0xf] %vm1944, %v1891
        %1967 = vst.msk [vmem:[#allocation3 + $0x58] sm:$0xf] %vm1944, %v1893
        %1968 = vst.msk [vmem:[#allocation3 + $0x5c] sm:$0xf] %vm1944, %v1895
        %1969 = vst.msk [vmem:[#allocation3 + $0x60] sm:$0xf] %vm1944, %v1897
        %1970 = vst.msk [vmem:[#allocation3 + $0x64] sm:$0xf] %vm1944, %v1899
        %1971 = vst.msk [vmem:[#allocation3 + $0x68] sm:$0xf] %vm1944, %v1901
        %1972 = vst.msk [vmem:[#allocation3 + $0x6c] sm:$0xf] %vm1944, %v1903
        %1973 = vst.msk [vmem:[#allocation3 + $0x70] sm:$0xf] %vm1944, %v1905
        %1974 = vst.msk [vmem:[#allocation3 + $0x74] sm:$0xf] %vm1944, %v1907
        %1975 = vst.msk [vmem:[#allocation3 + $0x78] sm:$0xf] %vm1944, %v1909
        %1976 = vst.msk [vmem:[#allocation3 + $0x7c] sm:$0xf] %vm1944, %v1911
        %v1977 = vld [vmem:[%s1526 + $0x2] sm:$0xff]
        %v1978 = vld [vmem:[%s1526 + $0xa] sm:$0xff]
        %v1979 = vld [vmem:[%s1526 + $0x1a] sm:$0xff]
        %v1980 = vld [vmem:[%s1526 + $0x22] sm:$0xff]
        %v1981 = vld [vmem:[%s1526 + $0x32] sm:$0xff]
        %v1982 = vld [vmem:[%s1526 + $0x3a] sm:$0xff]
        %v1983 = vld [vmem:[%s1526 + $0x4a] sm:$0xff]
        %v1984 = vld [vmem:[%s1526 + $0x52] sm:$0xff]
        %v1985 = vld [vmem:[%s1526 + $0x62] sm:$0xff]
        %v1986 = vld [vmem:[%s1526 + $0x6a] sm:$0xff]
        %v1987 = vld [vmem:[%s1526 + $0x7a] sm:$0xff]
        %v1988 = vld [vmem:[%s1526 + $0x82] sm:$0xff]
        %v1989 = vld [vmem:[%s1526 + $0x92] sm:$0xff]
        %v1990 = vld [vmem:[%s1526 + $0x9a] sm:$0xff]
        %v1991 = vld [vmem:[%s1526 + $0xaa] sm:$0xff]
        %v1992 = vld [vmem:[%s1526 + $0xb2] sm:$0xff]
        %v1993 = vld [vmem:[%s1526 + $0xc2] sm:$0xff]
        %v1994 = vld [vmem:[%s1526 + $0xca] sm:$0xff]
        %v1995 = vld [vmem:[%s1526 + $0xda] sm:$0xff]
        %v1996 = vld [vmem:[%s1526 + $0xe2] sm:$0xff]
        %v1997 = vld [vmem:[%s1526 + $0xf2] sm:$0xff]
        %v1998 = vld [vmem:[%s1526 + $0xfa] sm:$0xff]
        %v1999 = vld [vmem:[%s1526 + $0x10a] sm:$0xff]
        %v2000 = vld [vmem:[%s1526 + $0x112] sm:$0xff]
        %v2001 = vld [vmem:[%s1526 + $0x122] sm:$0xff]
        %v2002 = vld [vmem:[%s1526 + $0x12a] sm:$0xff]
        %v2003 = vld [vmem:[%s1526 + $0x13a] sm:$0xff]
        %v2004 = vld [vmem:[%s1526 + $0x142] sm:$0xff]
        %v2005 = vld [vmem:[%s1526 + $0x152] sm:$0xff]
        %v2006 = vld [vmem:[%s1526 + $0x15a] sm:$0xff]
        %v2007 = vld [vmem:[%s1526 + $0x16a] sm:$0xff]
        %v2008 = vld [vmem:[%s1526 + $0x172] sm:$0xff]
        %v2009 = vpack.c.bf16 %v1977, %v1977
        %v2010 = vpack.c.bf16 %v1978, %v1978
        %v2011 = vpack.c.bf16 %v1979, %v1979
        %v2012 = vpack.c.bf16 %v1980, %v1980
        %v2013 = vpack.c.bf16 %v1981, %v1981
        %v2014 = vpack.c.bf16 %v1982, %v1982
        %v2015 = vpack.c.bf16 %v1983, %v1983
        %v2016 = vpack.c.bf16 %v1984, %v1984
        %v2017 = vpack.c.bf16 %v1985, %v1985
        %v2018 = vpack.c.bf16 %v1986, %v1986
        %v2019 = vpack.c.bf16 %v1987, %v1987
        %v2020 = vpack.c.bf16 %v1988, %v1988
        %v2021 = vpack.c.bf16 %v1989, %v1989
        %v2022 = vpack.c.bf16 %v1990, %v1990
        %v2023 = vpack.c.bf16 %v1991, %v1991
        %v2024 = vpack.c.bf16 %v1992, %v1992
        %v2025 = vpack.c.bf16 %v1993, %v1993
        %v2026 = vpack.c.bf16 %v1994, %v1994
        %v2027 = vpack.c.bf16 %v1995, %v1995
        %v2028 = vpack.c.bf16 %v1996, %v1996
        %v2029 = vpack.c.bf16 %v1997, %v1997
        %v2030 = vpack.c.bf16 %v1998, %v1998
        %v2031 = vpack.c.bf16 %v1999, %v1999
        %v2032 = vpack.c.bf16 %v2000, %v2000
        %v2033 = vpack.c.bf16 %v2001, %v2001
        %v2034 = vpack.c.bf16 %v2002, %v2002
        %v2035 = vpack.c.bf16 %v2003, %v2003
        %v2036 = vpack.c.bf16 %v2004, %v2004
        %v2037 = vpack.c.bf16 %v2005, %v2005
        %v2038 = vpack.c.bf16 %v2006, %v2006
        %v2039 = vpack.c.bf16 %v2007, %v2007
        %v2040 = vpack.c.bf16 %v2008, %v2008
        %2073 = vrot.lane.b32.xlu0 %v2009, 32
        %v2074 = vpop.permute.xlu0 %2073
        %2075 = vrot.lane.b32.xlu0 %v2010, 32
        %v2076 = vpop.permute.xlu0 %2075
        %2077 = vrot.lane.b32.xlu0 %v2011, 32
        %v2078 = vpop.permute.xlu0 %2077
        %2079 = vrot.lane.b32.xlu0 %v2012, 32
        %v2080 = vpop.permute.xlu0 %2079
        %2081 = vrot.lane.b32.xlu0 %v2013, 32
        %v2082 = vpop.permute.xlu0 %2081
        %2083 = vrot.lane.b32.xlu0 %v2014, 32
        %v2084 = vpop.permute.xlu0 %2083
        %2085 = vrot.lane.b32.xlu0 %v2015, 32
        %v2086 = vpop.permute.xlu0 %2085
        %2087 = vrot.lane.b32.xlu0 %v2016, 32
        %v2088 = vpop.permute.xlu0 %2087
        %2089 = vrot.lane.b32.xlu0 %v2017, 32
        %v2090 = vpop.permute.xlu0 %2089
        %2091 = vrot.lane.b32.xlu0 %v2018, 32
        %v2092 = vpop.permute.xlu0 %2091
        %2093 = vrot.lane.b32.xlu0 %v2019, 32
        %v2094 = vpop.permute.xlu0 %2093
        %2095 = vrot.lane.b32.xlu0 %v2020, 32
        %v2096 = vpop.permute.xlu0 %2095
        %2097 = vrot.lane.b32.xlu0 %v2021, 32
        %v2098 = vpop.permute.xlu0 %2097
        %2099 = vrot.lane.b32.xlu0 %v2022, 32
        %v2100 = vpop.permute.xlu0 %2099
        %2101 = vrot.lane.b32.xlu0 %v2023, 32
        %v2102 = vpop.permute.xlu0 %2101
        %2103 = vrot.lane.b32.xlu0 %v2024, 32
        %v2104 = vpop.permute.xlu0 %2103
        %2105 = vrot.lane.b32.xlu0 %v2025, 32
        %v2106 = vpop.permute.xlu0 %2105
        %2107 = vrot.lane.b32.xlu0 %v2026, 32
        %v2108 = vpop.permute.xlu0 %2107
        %2109 = vrot.lane.b32.xlu0 %v2027, 32
        %v2110 = vpop.permute.xlu0 %2109
        %2111 = vrot.lane.b32.xlu0 %v2028, 32
        %v2112 = vpop.permute.xlu0 %2111
        %2113 = vrot.lane.b32.xlu0 %v2029, 32
        %v2114 = vpop.permute.xlu0 %2113
        %2115 = vrot.lane.b32.xlu0 %v2030, 32
        %v2116 = vpop.permute.xlu0 %2115
        %2117 = vrot.lane.b32.xlu0 %v2031, 32
        %v2118 = vpop.permute.xlu0 %2117
        %2119 = vrot.lane.b32.xlu0 %v2032, 32
        %v2120 = vpop.permute.xlu0 %2119
        %2121 = vrot.lane.b32.xlu0 %v2033, 32
        %v2122 = vpop.permute.xlu0 %2121
        %2123 = vrot.lane.b32.xlu0 %v2034, 32
        %v2124 = vpop.permute.xlu0 %2123
        %2125 = vrot.lane.b32.xlu0 %v2035, 32
        %v2126 = vpop.permute.xlu0 %2125
        %2127 = vrot.lane.b32.xlu0 %v2036, 32
        %v2128 = vpop.permute.xlu0 %2127
        %2129 = vrot.lane.b32.xlu0 %v2037, 32
        %v2130 = vpop.permute.xlu0 %2129
        %2131 = vrot.lane.b32.xlu0 %v2038, 32
        %v2132 = vpop.permute.xlu0 %2131
        %2133 = vrot.lane.b32.xlu0 %v2039, 32
        %v2134 = vpop.permute.xlu0 %2133
        %2135 = vrot.lane.b32.xlu0 %v2040, 32
        %v2136 = vpop.permute.xlu0 %2135
        %vm2169 = vcmask 290048
        %2170 = vst.msk [vmem:[#allocation3] sm:$0xf] %vm2169, %v2074
        %2171 = vst.msk [vmem:[#allocation3 + $0x4] sm:$0xf] %vm2169, %v2076
        %2172 = vst.msk [vmem:[#allocation3 + $0x8] sm:$0xf] %vm2169, %v2078
        %2173 = vst.msk [vmem:[#allocation3 + $0xc] sm:$0xf] %vm2169, %v2080
        %2174 = vst.msk [vmem:[#allocation3 + $0x10] sm:$0xf] %vm2169, %v2082
        %2175 = vst.msk [vmem:[#allocation3 + $0x14] sm:$0xf] %vm2169, %v2084
        %2176 = vst.msk [vmem:[#allocation3 + $0x18] sm:$0xf] %vm2169, %v2086
        %2177 = vst.msk [vmem:[#allocation3 + $0x1c] sm:$0xf] %vm2169, %v2088
        %2178 = vst.msk [vmem:[#allocation3 + $0x20] sm:$0xf] %vm2169, %v2090
        %2179 = vst.msk [vmem:[#allocation3 + $0x24] sm:$0xf] %vm2169, %v2092
        %2180 = vst.msk [vmem:[#allocation3 + $0x28] sm:$0xf] %vm2169, %v2094
        %2181 = vst.msk [vmem:[#allocation3 + $0x2c] sm:$0xf] %vm2169, %v2096
        %2182 = vst.msk [vmem:[#allocation3 + $0x30] sm:$0xf] %vm2169, %v2098
        %2183 = vst.msk [vmem:[#allocation3 + $0x34] sm:$0xf] %vm2169, %v2100
        %2184 = vst.msk [vmem:[#allocation3 + $0x38] sm:$0xf] %vm2169, %v2102
        %2185 = vst.msk [vmem:[#allocation3 + $0x3c] sm:$0xf] %vm2169, %v2104
        %2186 = vst.msk [vmem:[#allocation3 + $0x40] sm:$0xf] %vm2169, %v2106
        %2187 = vst.msk [vmem:[#allocation3 + $0x44] sm:$0xf] %vm2169, %v2108
        %2188 = vst.msk [vmem:[#allocation3 + $0x48] sm:$0xf] %vm2169, %v2110
        %2189 = vst.msk [vmem:[#allocation3 + $0x4c] sm:$0xf] %vm2169, %v2112
        %2190 = vst.msk [vmem:[#allocation3 + $0x50] sm:$0xf] %vm2169, %v2114
        %2191 = vst.msk [vmem:[#allocation3 + $0x54] sm:$0xf] %vm2169, %v2116
        %2192 = vst.msk [vmem:[#allocation3 + $0x58] sm:$0xf] %vm2169, %v2118
        %2193 = vst.msk [vmem:[#allocation3 + $0x5c] sm:$0xf] %vm2169, %v2120
        %2194 = vst.msk [vmem:[#allocation3 + $0x60] sm:$0xf] %vm2169, %v2122
        %2195 = vst.msk [vmem:[#allocation3 + $0x64] sm:$0xf] %vm2169, %v2124
        %2196 = vst.msk [vmem:[#allocation3 + $0x68] sm:$0xf] %vm2169, %v2126
        %2197 = vst.msk [vmem:[#allocation3 + $0x6c] sm:$0xf] %vm2169, %v2128
        %2198 = vst.msk [vmem:[#allocation3 + $0x70] sm:$0xf] %vm2169, %v2130
        %2199 = vst.msk [vmem:[#allocation3 + $0x74] sm:$0xf] %vm2169, %v2132
        %2200 = vst.msk [vmem:[#allocation3 + $0x78] sm:$0xf] %vm2169, %v2134
        %2201 = vst.msk [vmem:[#allocation3 + $0x7c] sm:$0xf] %vm2169, %v2136
        %v2202 = vld [vmem:[#allocation3] sm:$0xf]
        %v2203 = vld [vmem:[#allocation3 + $0x4] sm:$0xf]
        %v2204 = vld [vmem:[#allocation3 + $0x8] sm:$0xf]
        %v2205 = vld [vmem:[#allocation3 + $0xc] sm:$0xf]
        %v2206 = vld [vmem:[#allocation3 + $0x10] sm:$0xf]
        %v2207 = vld [vmem:[#allocation3 + $0x14] sm:$0xf]
        %v2208 = vld [vmem:[#allocation3 + $0x18] sm:$0xf]
        %v2209 = vld [vmem:[#allocation3 + $0x1c] sm:$0xf]
        %v2210 = vld [vmem:[#allocation3 + $0x20] sm:$0xf]
        %v2211 = vld [vmem:[#allocation3 + $0x24] sm:$0xf]
        %v2212 = vld [vmem:[#allocation3 + $0x28] sm:$0xf]
        %v2213 = vld [vmem:[#allocation3 + $0x2c] sm:$0xf]
        %v2214 = vld [vmem:[#allocation3 + $0x30] sm:$0xf]
        %v2215 = vld [vmem:[#allocation3 + $0x34] sm:$0xf]
        %v2216 = vld [vmem:[#allocation3 + $0x38] sm:$0xf]
        %v2217 = vld [vmem:[#allocation3 + $0x3c] sm:$0xf]
        %v2218 = vld [vmem:[#allocation3 + $0x40] sm:$0xf]
        %v2219 = vld [vmem:[#allocation3 + $0x44] sm:$0xf]
        %v2220 = vld [vmem:[#allocation3 + $0x48] sm:$0xf]
        %v2221 = vld [vmem:[#allocation3 + $0x4c] sm:$0xf]
        %v2222 = vld [vmem:[#allocation3 + $0x50] sm:$0xf]
        %v2223 = vld [vmem:[#allocation3 + $0x54] sm:$0xf]
        %v2224 = vld [vmem:[#allocation3 + $0x58] sm:$0xf]
        %v2225 = vld [vmem:[#allocation3 + $0x5c] sm:$0xf]
        %v2226 = vld [vmem:[#allocation3 + $0x60] sm:$0xf]
        %v2227 = vld [vmem:[#allocation3 + $0x64] sm:$0xf]
        %v2228 = vld [vmem:[#allocation3 + $0x68] sm:$0xf]
        %v2229 = vld [vmem:[#allocation3 + $0x6c] sm:$0xf]
        %v2230 = vld [vmem:[#allocation3 + $0x70] sm:$0xf]
        %v2231 = vld [vmem:[#allocation3 + $0x74] sm:$0xf]
        %v2232 = vld [vmem:[#allocation3 + $0x78] sm:$0xf]
        %v2233 = vld [vmem:[#allocation3 + $0x7c] sm:$0xf]
        %v2234 = vld [vmem:[%s1] sm:$0xf]
        %v2235 = vld [vmem:[%s1 + $0x4] sm:$0xf]
        %v2236 = vld [vmem:[%s1 + $0x8] sm:$0xf]
        %v2237 = vld [vmem:[%s1 + $0xc] sm:$0xf]
        %v2238 = vld [vmem:[%s1 + $0x10] sm:$0x3]
        %v2271 = vunpack.c.l.b16 %v2202
        %v2272 = vunpack.c.l.b16 %v2203
        %v2273 = vunpack.c.l.b16 %v2204
        %v2274 = vunpack.c.l.b16 %v2205
        %v2275 = vunpack.c.l.b16 %v2206
        %v2276 = vunpack.c.l.b16 %v2207
        %v2277 = vunpack.c.l.b16 %v2208
        %v2278 = vunpack.c.l.b16 %v2209
        %v2279 = vunpack.c.l.b16 %v2210
        %v2280 = vunpack.c.l.b16 %v2211
        %v2281 = vunpack.c.l.b16 %v2212
        %v2282 = vunpack.c.l.b16 %v2213
        %v2283 = vunpack.c.l.b16 %v2214
        %v2284 = vunpack.c.l.b16 %v2215
        %v2285 = vunpack.c.l.b16 %v2216
        %v2286 = vunpack.c.l.b16 %v2217
        %v2287 = vunpack.c.l.b16 %v2218
        %v2288 = vunpack.c.l.b16 %v2219
        %v2289 = vunpack.c.l.b16 %v2220
        %v2290 = vunpack.c.l.b16 %v2221
        %v2291 = vunpack.c.l.b16 %v2222
        %v2292 = vunpack.c.l.b16 %v2223
        %v2293 = vunpack.c.l.b16 %v2224
        %v2294 = vunpack.c.l.b16 %v2225
        %v2295 = vunpack.c.l.b16 %v2226
        %v2296 = vunpack.c.l.b16 %v2227
        %v2297 = vunpack.c.l.b16 %v2228
        %v2298 = vunpack.c.l.b16 %v2229
        %v2299 = vunpack.c.l.b16 %v2230
        %v2300 = vunpack.c.l.b16 %v2231
        %v2301 = vunpack.c.l.b16 %v2232
        %v2302 = vunpack.c.l.b16 %v2233
        %v2303 = vpack.c.b16 %v2272, %v2271
        %v2304 = vpack.c.b16 %v2274, %v2273
        %v2305 = vpack.c.b16 %v2276, %v2275
        %v2306 = vpack.c.b16 %v2278, %v2277
        %v2307 = vpack.c.b16 %v2280, %v2279
        %v2308 = vpack.c.b16 %v2282, %v2281
        %v2309 = vpack.c.b16 %v2284, %v2283
        %v2310 = vpack.c.b16 %v2286, %v2285
        %v2311 = vpack.c.b16 %v2288, %v2287
        %v2312 = vpack.c.b16 %v2290, %v2289
        %v2313 = vpack.c.b16 %v2292, %v2291
        %v2314 = vpack.c.b16 %v2294, %v2293
        %v2315 = vpack.c.b16 %v2296, %v2295
        %v2316 = vpack.c.b16 %v2298, %v2297
        %v2317 = vpack.c.b16 %v2300, %v2299
        %v2318 = vpack.c.b16 %v2302, %v2301
        %v2324 = vunpack.c.l.b16 %v2234
        %v2325 = vunpack.c.l.b16 %v2235
        %v2326 = vunpack.c.l.b16 %v2236
        %v2327 = vunpack.c.l.b16 %v2237
        %v2328 = vunpack.c.l.b16 %v2238
        %v2329 = vpack.c.b16 %v2325, %v2324
        %v2330 = vpack.c.b16 %v2327, %v2326
        %v2331 = vpack.c.b16 %v2328, %v2328
        %vm2334 = vcmask 293888
        %v2336 = vsel %vm2334, %v2303, 0
        %v2339 = vsel %vm2334, %v2304, 0
        %v2342 = vsel %vm2334, %v2305, 0
        %v2345 = vsel %vm2334, %v2306, 0
        %v2348 = vsel %vm2334, %v2307, 0
        %v2351 = vsel %vm2334, %v2308, 0
        %v2354 = vsel %vm2334, %v2309, 0
        %v2357 = vsel %vm2334, %v2310, 0
        %v2360 = vsel %vm2334, %v2311, 0
        %v2363 = vsel %vm2334, %v2312, 0
        %v2366 = vsel %vm2334, %v2313, 0
        %v2369 = vsel %vm2334, %v2314, 0
        %v2372 = vsel %vm2334, %v2315, 0
        %v2375 = vsel %vm2334, %v2316, 0
        %v2378 = vsel %vm2334, %v2317, 0
        %v2381 = vsel %vm2334, %v2318, 0
        %vm2383 = vcmask 1041408
        %v2385 = vsel %vm2383, %v2331, 0
        %2387 = vmatpush.bf16.msra.mxu0 0
        %2388 = vmatpush.bf16.msra.mxu0 0
        %2389 = vmatpush.bf16.msra.mxu0 0
        %2390 = vmatpush.bf16.msra.mxu0 0
        %2391 = vmatpush.bf16.msra.mxu0 0
        %2392 = vmatpush.bf16.msra.mxu0 %v2385
        %2393 = vmatpush.bf16.msra.mxu0 %v2330
        %2394 = vmatpush.bf16.msra.mxu0 %v2329
        %2395 = vmatmul.bf16.gmra.mxu0 %v2336
        %v2396 = vpop.f32.mrf.mxu0
        %v2397 = vadd.f32 0.0, %v2396
        %v2398 = vpop.f32.mrf.mxu0
        %v2399 = vadd.f32 0.0, %v2398
        %2400 = vmatmul.bf16.gmra.mxu0 %v2339
        %v2401 = vpop.f32.mrf.mxu0
        %v2402 = vadd.f32 0.0, %v2401
        %v2403 = vpop.f32.mrf.mxu0
        %v2404 = vadd.f32 0.0, %v2403
        %2405 = vmatmul.bf16.gmra.mxu0 %v2342
        %v2406 = vpop.f32.mrf.mxu0
        %v2407 = vadd.f32 0.0, %v2406
        %v2408 = vpop.f32.mrf.mxu0
        %v2409 = vadd.f32 0.0, %v2408
        %2410 = vmatmul.bf16.gmra.mxu0 %v2345
        %v2411 = vpop.f32.mrf.mxu0
        %v2412 = vadd.f32 0.0, %v2411
        %v2413 = vpop.f32.mrf.mxu0
        %v2414 = vadd.f32 0.0, %v2413
        %2415 = vmatmul.bf16.gmra.mxu0 %v2348
        %v2416 = vpop.f32.mrf.mxu0
        %v2417 = vadd.f32 0.0, %v2416
        %v2418 = vpop.f32.mrf.mxu0
        %v2419 = vadd.f32 0.0, %v2418
        %2420 = vmatmul.bf16.gmra.mxu0 %v2351
        %v2421 = vpop.f32.mrf.mxu0
        %v2422 = vadd.f32 0.0, %v2421
        %v2423 = vpop.f32.mrf.mxu0
        %v2424 = vadd.f32 0.0, %v2423
        %2425 = vmatmul.bf16.gmra.mxu0 %v2354
        %v2426 = vpop.f32.mrf.mxu0
        %v2427 = vadd.f32 0.0, %v2426
        %v2428 = vpop.f32.mrf.mxu0
        %v2429 = vadd.f32 0.0, %v2428
        %2430 = vmatmul.bf16.gmra.mxu0 %v2357
        %v2431 = vpop.f32.mrf.mxu0
        %v2432 = vadd.f32 0.0, %v2431
        %v2433 = vpop.f32.mrf.mxu0
        %v2434 = vadd.f32 0.0, %v2433
        %2435 = vmatmul.bf16.gmra.mxu0 %v2360
        %v2436 = vpop.f32.mrf.mxu0
        %v2437 = vadd.f32 0.0, %v2436
        %v2438 = vpop.f32.mrf.mxu0
        %v2439 = vadd.f32 0.0, %v2438
        %2440 = vmatmul.bf16.gmra.mxu0 %v2363
        %v2441 = vpop.f32.mrf.mxu0
        %v2442 = vadd.f32 0.0, %v2441
        %v2443 = vpop.f32.mrf.mxu0
        %v2444 = vadd.f32 0.0, %v2443
        %2445 = vmatmul.bf16.gmra.mxu0 %v2366
        %v2446 = vpop.f32.mrf.mxu0
        %v2447 = vadd.f32 0.0, %v2446
        %v2448 = vpop.f32.mrf.mxu0
        %v2449 = vadd.f32 0.0, %v2448
        %2450 = vmatmul.bf16.gmra.mxu0 %v2369
        %v2451 = vpop.f32.mrf.mxu0
        %v2452 = vadd.f32 0.0, %v2451
        %v2453 = vpop.f32.mrf.mxu0
        %v2454 = vadd.f32 0.0, %v2453
        %2455 = vmatmul.bf16.gmra.mxu0 %v2372
        %v2456 = vpop.f32.mrf.mxu0
        %v2457 = vadd.f32 0.0, %v2456
        %v2458 = vpop.f32.mrf.mxu0
        %v2459 = vadd.f32 0.0, %v2458
        %2460 = vmatmul.bf16.gmra.mxu0 %v2375
        %v2461 = vpop.f32.mrf.mxu0
        %v2462 = vadd.f32 0.0, %v2461
        %v2463 = vpop.f32.mrf.mxu0
        %v2464 = vadd.f32 0.0, %v2463
        %2465 = vmatmul.bf16.gmra.mxu0 %v2378
        %v2466 = vpop.f32.mrf.mxu0
        %v2467 = vadd.f32 0.0, %v2466
        %v2468 = vpop.f32.mrf.mxu0
        %v2469 = vadd.f32 0.0, %v2468
        %2470 = vmatmul.bf16.gmra.mxu0 %v2381
        %v2471 = vpop.f32.mrf.mxu0
        %v2472 = vadd.f32 0.0, %v2471
        %v2473 = vpop.f32.mrf.mxu0
        %v2474 = vadd.f32 0.0, %v2473
        %2475 = vdwg.mxu0
        %2476 = vst.msk [vmem:[%s181] sm:$0xff] %vm215, %v2397
        %2477 = vst.msk [vmem:[%s181 + $0x8] sm:$0xff] %vm215, %v2399
        %2478 = vst.msk [vmem:[%s181 + $0x10] sm:$0xff] %vm215, %v2402
        %2479 = vst.msk [vmem:[%s181 + $0x18] sm:$0xff] %vm215, %v2404
        %2480 = vst.msk [vmem:[%s181 + $0x20] sm:$0xff] %vm215, %v2407
        %2481 = vst.msk [vmem:[%s181 + $0x28] sm:$0xff] %vm215, %v2409
        %2482 = vst.msk [vmem:[%s181 + $0x30] sm:$0xff] %vm215, %v2412
        %2483 = vst.msk [vmem:[%s181 + $0x38] sm:$0xff] %vm215, %v2414
        %2484 = vst.msk [vmem:[%s181 + $0x40] sm:$0xff] %vm215, %v2417
        %2485 = vst.msk [vmem:[%s181 + $0x48] sm:$0xff] %vm215, %v2419
        %2486 = vst.msk [vmem:[%s181 + $0x50] sm:$0xff] %vm215, %v2422
        %2487 = vst.msk [vmem:[%s181 + $0x58] sm:$0xff] %vm215, %v2424
        %2488 = vst.msk [vmem:[%s181 + $0x60] sm:$0xff] %vm215, %v2427
        %2489 = vst.msk [vmem:[%s181 + $0x68] sm:$0xff] %vm215, %v2429
        %2490 = vst.msk [vmem:[%s181 + $0x70] sm:$0xff] %vm215, %v2432
        %2491 = vst.msk [vmem:[%s181 + $0x78] sm:$0xff] %vm215, %v2434
        %2492 = vst.msk [vmem:[%s181 + $0x80] sm:$0xff] %vm215, %v2437
        %2493 = vst.msk [vmem:[%s181 + $0x88] sm:$0xff] %vm215, %v2439
        %2494 = vst.msk [vmem:[%s181 + $0x90] sm:$0xff] %vm215, %v2442
        %2495 = vst.msk [vmem:[%s181 + $0x98] sm:$0xff] %vm215, %v2444
        %2496 = vst.msk [vmem:[%s181 + $0xa0] sm:$0xff] %vm215, %v2447
        %2497 = vst.msk [vmem:[%s181 + $0xa8] sm:$0xff] %vm215, %v2449
        %2498 = vst.msk [vmem:[%s181 + $0xb0] sm:$0xff] %vm215, %v2452
        %2499 = vst.msk [vmem:[%s181 + $0xb8] sm:$0xff] %vm215, %v2454
        %2500 = vst.msk [vmem:[%s181 + $0xc0] sm:$0xff] %vm215, %v2457
        %2501 = vst.msk [vmem:[%s181 + $0xc8] sm:$0xff] %vm215, %v2459
        %2502 = vst.msk [vmem:[%s181 + $0xd0] sm:$0xff] %vm215, %v2462
        %2503 = vst.msk [vmem:[%s181 + $0xd8] sm:$0xff] %vm215, %v2464
        %2504 = vst.msk [vmem:[%s181 + $0xe0] sm:$0xff] %vm215, %v2467
        %2505 = vst.msk [vmem:[%s181 + $0xe8] sm:$0xff] %vm215, %v2469
        %2506 = vst.msk [vmem:[%s181 + $0xf0] sm:$0xff] %vm215, %v2472
        %2507 = vst.msk [vmem:[%s181 + $0xf8] sm:$0xff] %vm215, %v2474
        %v2508 = vsel %vm215, %v2397, 0.0
        %v2509 = vsel %vm215, %v2399, 0.0
        %v2510 = vadd.f32 %v2508, %v2509
        %v2511 = vsel %vm215, %v2402, 0.0
        %v2512 = vadd.f32 %v2510, %v2511
        %v2513 = vsel %vm215, %v2404, 0.0
        %v2514 = vadd.f32 %v2512, %v2513
        %v2515 = vsel %vm215, %v2407, 0.0
        %v2516 = vadd.f32 %v2514, %v2515
        %v2517 = vsel %vm215, %v2409, 0.0
        %v2518 = vadd.f32 %v2516, %v2517
        %v2519 = vsel %vm215, %v2412, 0.0
        %v2520 = vadd.f32 %v2518, %v2519
        %v2521 = vsel %vm215, %v2414, 0.0
        %v2522 = vadd.f32 %v2520, %v2521
        %v2523 = vsel %vm215, %v2417, 0.0
        %v2524 = vadd.f32 %v2522, %v2523
        %v2525 = vsel %vm215, %v2419, 0.0
        %v2526 = vadd.f32 %v2524, %v2525
        %v2527 = vsel %vm215, %v2422, 0.0
        %v2528 = vadd.f32 %v2526, %v2527
        %v2529 = vsel %vm215, %v2424, 0.0
        %v2530 = vadd.f32 %v2528, %v2529
        %v2531 = vsel %vm215, %v2427, 0.0
        %v2532 = vadd.f32 %v2530, %v2531
        %v2533 = vsel %vm215, %v2429, 0.0
        %v2534 = vadd.f32 %v2532, %v2533
        %v2535 = vsel %vm215, %v2432, 0.0
        %v2536 = vadd.f32 %v2534, %v2535
        %v2537 = vsel %vm215, %v2434, 0.0
        %v2538 = vadd.f32 %v2536, %v2537
        %v2539 = vsel %vm215, %v2437, 0.0
        %v2540 = vadd.f32 %v2538, %v2539
        %v2541 = vsel %vm215, %v2439, 0.0
        %v2542 = vadd.f32 %v2540, %v2541
        %v2543 = vsel %vm215, %v2442, 0.0
        %v2544 = vadd.f32 %v2542, %v2543
        %v2545 = vsel %vm215, %v2444, 0.0
        %v2546 = vadd.f32 %v2544, %v2545
        %v2547 = vsel %vm215, %v2447, 0.0
        %v2548 = vadd.f32 %v2546, %v2547
        %v2549 = vsel %vm215, %v2449, 0.0
        %v2550 = vadd.f32 %v2548, %v2549
        %v2551 = vsel %vm215, %v2452, 0.0
        %v2552 = vadd.f32 %v2550, %v2551
        %v2553 = vsel %vm215, %v2454, 0.0
        %v2554 = vadd.f32 %v2552, %v2553
        %v2555 = vsel %vm215, %v2457, 0.0
        %v2556 = vadd.f32 %v2554, %v2555
        %v2557 = vsel %vm215, %v2459, 0.0
        %v2558 = vadd.f32 %v2556, %v2557
        %v2559 = vsel %vm215, %v2462, 0.0
        %v2560 = vadd.f32 %v2558, %v2559
        %v2561 = vsel %vm215, %v2464, 0.0
        %v2562 = vadd.f32 %v2560, %v2561
        %v2563 = vsel %vm215, %v2467, 0.0
        %v2564 = vadd.f32 %v2562, %v2563
        %v2565 = vsel %vm215, %v2469, 0.0
        %v2566 = vadd.f32 %v2564, %v2565
        %v2567 = vsel %vm215, %v2472, 0.0
        %v2568 = vadd.f32 %v2566, %v2567
        %v2569 = vsel %vm215, %v2474, 0.0
        %v2570 = vadd.f32 %v2568, %v2569
        %v2571 = vrot.slane %v2570, 4
        %v2572 = vadd.f32 %v2570, %v2571
        %v2573 = vrot.slane %v2572, 2
        %v2574 = vadd.f32 %v2572, %v2573
        %v2575 = vrot.slane %v2574, 1
        %v2576 = vadd.f32 %v2574, %v2575
        %vm2577 = vcmask 24576
        %2578 = vst.msk [vmem:[%s171] sm:$0x1] %vm2577, %v2576
        %v2579 = vmul.f32 %v2397, %v2397
        %v2580 = vmul.f32 %v2399, %v2399
        %v2581 = vmul.f32 %v2402, %v2402
        %v2582 = vmul.f32 %v2404, %v2404
        %v2583 = vmul.f32 %v2407, %v2407
        %v2584 = vmul.f32 %v2409, %v2409
        %v2585 = vmul.f32 %v2412, %v2412
        %v2586 = vmul.f32 %v2414, %v2414
        %v2587 = vmul.f32 %v2417, %v2417
        %v2588 = vmul.f32 %v2419, %v2419
        %v2589 = vmul.f32 %v2422, %v2422
        %v2590 = vmul.f32 %v2424, %v2424
        %v2591 = vmul.f32 %v2427, %v2427
        %v2592 = vmul.f32 %v2429, %v2429
        %v2593 = vmul.f32 %v2432, %v2432
        %v2594 = vmul.f32 %v2434, %v2434
        %v2595 = vmul.f32 %v2437, %v2437
        %v2596 = vmul.f32 %v2439, %v2439
        %v2597 = vmul.f32 %v2442, %v2442
        %v2598 = vmul.f32 %v2444, %v2444
        %v2599 = vmul.f32 %v2447, %v2447
        %v2600 = vmul.f32 %v2449, %v2449
        %v2601 = vmul.f32 %v2452, %v2452
        %v2602 = vmul.f32 %v2454, %v2454
        %v2603 = vmul.f32 %v2457, %v2457
        %v2604 = vmul.f32 %v2459, %v2459
        %v2605 = vmul.f32 %v2462, %v2462
        %v2606 = vmul.f32 %v2464, %v2464
        %v2607 = vmul.f32 %v2467, %v2467
        %v2608 = vmul.f32 %v2469, %v2469
        %v2609 = vmul.f32 %v2472, %v2472
        %v2610 = vmul.f32 %v2474, %v2474
        %v2611 = vsel %vm215, %v2579, 0.0
        %v2612 = vsel %vm215, %v2580, 0.0
        %v2613 = vadd.f32 %v2611, %v2612
        %v2614 = vsel %vm215, %v2581, 0.0
        %v2615 = vadd.f32 %v2613, %v2614
        %v2616 = vsel %vm215, %v2582, 0.0
        %v2617 = vadd.f32 %v2615, %v2616
        %v2618 = vsel %vm215, %v2583, 0.0
        %v2619 = vadd.f32 %v2617, %v2618
        %v2620 = vsel %vm215, %v2584, 0.0
        %v2621 = vadd.f32 %v2619, %v2620
        %v2622 = vsel %vm215, %v2585, 0.0
        %v2623 = vadd.f32 %v2621, %v2622
        %v2624 = vsel %vm215, %v2586, 0.0
        %v2625 = vadd.f32 %v2623, %v2624
        %v2626 = vsel %vm215, %v2587, 0.0
        %v2627 = vadd.f32 %v2625, %v2626
        %v2628 = vsel %vm215, %v2588, 0.0
        %v2629 = vadd.f32 %v2627, %v2628
        %v2630 = vsel %vm215, %v2589, 0.0
        %v2631 = vadd.f32 %v2629, %v2630
        %v2632 = vsel %vm215, %v2590, 0.0
        %v2633 = vadd.f32 %v2631, %v2632
        %v2634 = vsel %vm215, %v2591, 0.0
        %v2635 = vadd.f32 %v2633, %v2634
        %v2636 = vsel %vm215, %v2592, 0.0
        %v2637 = vadd.f32 %v2635, %v2636
        %v2638 = vsel %vm215, %v2593, 0.0
        %v2639 = vadd.f32 %v2637, %v2638
        %v2640 = vsel %vm215, %v2594, 0.0
        %v2641 = vadd.f32 %v2639, %v2640
        %v2642 = vsel %vm215, %v2595, 0.0
        %v2643 = vadd.f32 %v2641, %v2642
        %v2644 = vsel %vm215, %v2596, 0.0
        %v2645 = vadd.f32 %v2643, %v2644
        %v2646 = vsel %vm215, %v2597, 0.0
        %v2647 = vadd.f32 %v2645, %v2646
        %v2648 = vsel %vm215, %v2598, 0.0
        %v2649 = vadd.f32 %v2647, %v2648
        %v2650 = vsel %vm215, %v2599, 0.0
        %v2651 = vadd.f32 %v2649, %v2650
        %v2652 = vsel %vm215, %v2600, 0.0
        %v2653 = vadd.f32 %v2651, %v2652
        %v2654 = vsel %vm215, %v2601, 0.0
        %v2655 = vadd.f32 %v2653, %v2654
        %v2656 = vsel %vm215, %v2602, 0.0
        %v2657 = vadd.f32 %v2655, %v2656
        %v2658 = vsel %vm215, %v2603, 0.0
        %v2659 = vadd.f32 %v2657, %v2658
        %v2660 = vsel %vm215, %v2604, 0.0
        %v2661 = vadd.f32 %v2659, %v2660
        %v2662 = vsel %vm215, %v2605, 0.0
        %v2663 = vadd.f32 %v2661, %v2662
        %v2664 = vsel %vm215, %v2606, 0.0
        %v2665 = vadd.f32 %v2663, %v2664
        %v2666 = vsel %vm215, %v2607, 0.0
        %v2667 = vadd.f32 %v2665, %v2666
        %v2668 = vsel %vm215, %v2608, 0.0
        %v2669 = vadd.f32 %v2667, %v2668
        %v2670 = vsel %vm215, %v2609, 0.0
        %v2671 = vadd.f32 %v2669, %v2670
        %v2672 = vsel %vm215, %v2610, 0.0
        %v2673 = vadd.f32 %v2671, %v2672
        %v2674 = vrot.slane %v2673, 4
        %v2675 = vadd.f32 %v2673, %v2674
        %v2676 = vrot.slane %v2675, 2
        %v2677 = vadd.f32 %v2675, %v2676
        %v2678 = vrot.slane %v2677, 1
        %v2679 = vadd.f32 %v2677, %v2678
        %2680 = vst.msk [vmem:[%s171 + $0x1] sm:$0x1] %vm2577, %v2679
        %p2681 = scmp.lt.s32.totalorder %s18, 1
        %s2682 = scalar_select %p2681, %s18, 1
        %s2683 = smul.addr %s2682, 32
        %s2684 = smul.addr %s2683, 8
        %s2685 = scalar_lea.vmem %s2, %s2684
        %s2686 = sand.u32 %s99, 1
        %s2687 = scalar_lea.sflag [#allocation5], %s2686
        %s2688 = sand.u32 %s99, 1
        %s2689 = smul.addr %s2688, 2
        %s2690 = scalar_lea.vmem [#allocation4], %s2689
        // Predicated region
        $region29: #{tpu_custom_call.1} parent=27 // pred_check
          %p2691 = pneg %p83
        $region30: #{tpu_custom_call.1} parent=27 // pred_check_branch
          %2693 = sbr.rel (%p2691) target = $region32
        $region31: #{tpu_custom_call.1} parent=27 // pred_region
          _
        $region32: #{tpu_custom_call.1} parent=27 // pred_fallthru
          _
        // Predicated region
        $region33: #{tpu_custom_call.1} parent=27 // pred_check
          %p2694 = pneg %p109
        $region34: #{tpu_custom_call.1} parent=27 // pred_check_branch
          %2696 = sbr.rel (%p2694) target = $region36
        $region35: #{tpu_custom_call.1} parent=27 // pred_region
          %2698 = vsyncadd %s2687, 0
          %s2699 = smul.addr %s18, 2
          %s2700 = scalar_lea.hbm %s3, %s2699
          %s2702 = sshll.u32 %s2690, 4
          %s2703 = int_to_ptr.vmem [resolvable:$true] %s2702
          %s2704 = sshll.u32 %s2700, 4
          %s2705 = int_to_ptr.hbm [resolvable:$true] %s2704
          %2707 = dma.vmem_to_hbm [thread:$0]  %s2703, 32, %s2705, %s2687
        $region36: #{tpu_custom_call.1} parent=27 // pred_fallthru
          _
      $region28: #{tpu_custom_call.1} parent=5 // pred_fallthru
        _
      %p2708 = scmp.le.s32.totalorder 2, %s13
      // Predicated region
      $region37: #{tpu_custom_call.1} parent=5 // pred_check
        %p2709 = pneg %p2708
      $region38: #{tpu_custom_call.1} parent=5 // pred_check_branch
        %2711 = sbr.rel (%p2709) target = $region40
      $region39: #{tpu_custom_call.1} parent=5 // pred_region
        %s2712 = ssub.s32 %s13, 2
        // Predicated region
        $region41: #{tpu_custom_call.1} parent=39 // pred_check
          %p2713 = pneg %p89
        $region42: #{tpu_custom_call.1} parent=39 // pred_check_branch
          %2715 = sbr.rel (%p2713) target = $region44
        $region43: #{tpu_custom_call.1} parent=39 // pred_region
          %p2716 = scmp.lt.s32.totalorder %s19, 1
          %s2717 = scalar_select %p2716, %s19, 1
          %s2718 = smul.addr %s2717, 32
          %s2719 = smul.addr %s2718, 8
          %s2720 = scalar_lea.vmem %s2, %s2719
        $region44: #{tpu_custom_call.1} parent=39 // pred_fallthru
          _
        // Predicated region
        $region45: #{tpu_custom_call.1} parent=39 // pred_check
          %p2721 = pneg %p115
        $region46: #{tpu_custom_call.1} parent=39 // pred_check_branch
          %2723 = sbr.rel (%p2721) target = $region48
        $region47: #{tpu_custom_call.1} parent=39 // pred_region
          %s2724 = sand.u32 %s100, 1
          %s2725 = scalar_lea.sflag [#allocation5], %s2724
          %s2726 = sand.u32 %s100, 1
          %s2727 = smul.addr %s2726, 2
          %s2728 = scalar_lea.vmem [#allocation4], %s2727
          %2730 = dma.done %s2725, 32
        $region48: #{tpu_custom_call.1} parent=39 // pred_fallthru
          _
      $region40: #{tpu_custom_call.1} parent=5 // pred_fallthru
        _
    $region6: #{tpu_custom_call.1} parent=1 // loop_footer
      %s17 = sadd.s32 1, %s13
    $region7: #{tpu_custom_call.1} parent=1 // loop_footer_branch
      %12 = sbr.rel target = $region3
    $region8: #{tpu_custom_call.1} parent=1 // loop_exit
      _
    %2731 = vsyncpa [#allocation5], 1
    %s2732 = scalar_lea.sflag [#allocation5], 1
    %2733 = vsyncpa %s2732, 1

</llo_original>
